<compile_context>
chip_gen: v6e
topology: v6e:2x2x1
jax: 0.10.0
libtpu: 0.0.40
codegen_flags: <defaults>
</compile_context>

<pallas_src>
import functools

import numpy as np
import jax
import jax.numpy as jnp
from jax.experimental import pallas as pl
from jax.experimental.pallas import tpu as pltpu


# ----------------------------------------------------------------------------
# Deterministic "parameter" construction (matches _fspecial_gauss_1d).
# ----------------------------------------------------------------------------
def _fspecial_gauss_1d(size: int, sigma: float) -> np.ndarray:
    coords = np.arange(size, dtype=np.float32)
    coords -= size // 2
    g = np.exp(-(coords ** 2) / (2.0 * sigma ** 2))
    g /= g.sum()
    return g.astype(np.float32)  # shape (size,)


def _toeplitz_filters(H: int, W: int, win: np.ndarray):
    """Banded matrices so that `T_h @ img @ T_w` == valid separable Gaussian."""
    ws = win.shape[0]
    hout, wout = H - ws + 1, W - ws + 1
    t_h = np.zeros((hout, H), np.float32)
    for i in range(hout):
        t_h[i, i:i + ws] = win
    t_w = np.zeros((W, wout), np.float32)
    for j in range(wout):
        t_w[j:j + ws, j] = win
    return t_h, t_w


# ----------------------------------------------------------------------------
# Pallas kernel: one batch (all C channels) per grid step.
# ----------------------------------------------------------------------------
def _ssim_batch_kernel(x_ref, y_ref, th_ref, tw_ref, out_ref, *,
                       C, H, W, hout, wout, c1, c2):
    # x_ref / y_ref : (C, H, W) VMEM refs (batch dim squeezed away)
    # th_ref        : (hout, H) Toeplitz filter (H direction)
    # tw_ref        : (W, wout) Toeplitz filter (W direction)
    # out_ref       : (C, 1, 1) per-channel spatial means
    th = th_ref[...]          # loaded once, reused for every channel/plane
    tw = tw_ref[...]
    inv_n = 1.0 / float(hout * wout)

    for c in range(C):        # static unroll; C is small (e.g. 3)
        x = x_ref[c].astype(jnp.float32)        # (H, W)
        y = y_ref[c].astype(jnp.float32)

        # Stack the 5 planes that share the same Gaussian filter along the
        # sublane (H) axis so the W-direction filter is one MXU matmul.
        stack = jnp.concatenate([x, y, x * x, y * y, x * y], axis=0)   # (5H, W)
        fw = jnp.dot(stack, tw, preferred_element_type=jnp.float32)    # (5H, wout)

        def hfilt(k):
            # H-direction filter for plane k: (hout, H) @ (H, wout) on MXU.
            return jnp.dot(th, fw[k * H:(k + 1) * H],
                           preferred_element_type=jnp.float32)

        mu1, mu2 = hfilt(0), hfilt(1)
        e_xx, e_yy, e_xy = hfilt(2), hfilt(3), hfilt(4)

        mu1_sq = mu1 * mu1
        mu2_sq = mu2 * mu2
        mu1_mu2 = mu1 * mu2
        sigma1_sq = e_xx - mu1_sq
        sigma2_sq = e_yy - mu2_sq
        sigma12 = e_xy - mu1_mu2

        cs_map = (2.0 * sigma12 + c2) / (sigma1_sq + sigma2_sq + c2)
        ssim_map = (2.0 * mu1_mu2 + c1) / (mu1_sq + mu2_sq + c1) * cs_map

        # Spatial mean -> per-channel SSIM (keepdims to stay vector-shaped).
        s = jnp.sum(ssim_map, axis=1, keepdims=True)     # (hout, 1)
        s = jnp.sum(s, axis=0, keepdims=True)            # (1, 1)
        out_ref[c] = s * inv_n


# ----------------------------------------------------------------------------
# Wrapper reproducing SSIM.forward semantics (data_range=255, size_average=True)
# ----------------------------------------------------------------------------
def ssim_pallas(X, Y, *, data_range=255.0, win_size=11, win_sigma=1.5,
                K=(0.01, 0.03), size_average=True, nonnegative_ssim=False):
    assert X.shape == Y.shape and X.ndim == 4, "expected NCHW inputs"
    B, C, H, W = X.shape
    assert H >= win_size and W >= win_size, "spatial dims must be >= win_size"
    # TODO(synk): the PyTorch warn-and-skip path for spatial dims < win_size is
    #             not implemented (asserted away instead).

    win = _fspecial_gauss_1d(win_size, win_sigma)
    t_h_np, t_w_np = _toeplitz_filters(H, W, win)
    hout, wout = H - win_size + 1, W - win_size + 1
    c1 = float((K[0] * data_range) ** 2)
    c2 = float((K[1] * data_range) ** 2)

    kernel = functools.partial(_ssim_batch_kernel, C=C, H=H, W=W,
                               hout=hout, wout=wout, c1=c1, c2=c2)

    xy_spec = pl.BlockSpec((pl.Squeezed(), C, H, W), lambda b: (b, 0, 0, 0))
    th_spec = pl.BlockSpec((hout, H), lambda b: (0, 0))
    tw_spec = pl.BlockSpec((W, wout), lambda b: (0, 0))
    out_spec = pl.BlockSpec((pl.Squeezed(), C, 1, 1), lambda b: (b, 0, 0, 0))

    # Rough per-step VMEM footprint: double-buffered x/y blocks + Toeplitz
    # matrices + one channel's filter/map temporaries.  Only raise the scoped
    # VMEM limit when we actually need more than the conservative default.
    plane_bytes = 4 * C * H * W
    temps_bytes = 4 * (5 * H * W + 5 * H * wout + 12 * hout * wout)
    need = 2 * 2 * plane_bytes + 2 * 4 * (hout * H + W * wout) + temps_bytes
    vmem_limit = None
    if need > 16 * 1024 * 1024:
        vmem_limit = int(min(max(2 * need, 32 * 1024 * 1024), 64 * 1024 * 1024))
    # TODO(synk): for very large planes (v7x has only 64 MiB VMEM) tile H/W in
    #             the grid with a (win_size-1) halo instead of keeping full
    #             planes resident.

    per_channel = pl.pallas_call(
        kernel,
        out_shape=jax.ShapeDtypeStruct((B, C, 1, 1), jnp.float32),
        grid_spec=pltpu.PrefetchScalarGridSpec(
            num_scalar_prefetch=0,
            grid=(B,),
            in_specs=[xy_spec, xy_spec, th_spec, tw_spec],
            out_specs=out_spec,
        ),
        compiler_params=pltpu.CompilerParams(
            dimension_semantics=("parallel",),
            vmem_limit_bytes=vmem_limit),
    )(X, Y, jnp.asarray(t_h_np), jnp.asarray(t_w_np))   # no wrapper-side casts

    ssim_per_channel = per_channel[:, :, 0, 0]           # (B, C)
    if nonnegative_ssim:
        ssim_per_channel = jnp.maximum(ssim_per_channel, 0.0)
    if size_average:
        return ssim_per_channel.mean()                   # scalar, like .item()
    return ssim_per_channel.mean(axis=1)


# ----------------------------------------------------------------------------
# Pure-JAX reference (correctness sanity check).
# ----------------------------------------------------------------------------
def _ssim_reference(X, Y, *, data_range=255.0, win_size=11, win_sigma=1.5,
                    K=(0.01, 0.03)):
    win = jnp.asarray(_fspecial_gauss_1d(win_size, win_sigma))
    c1 = (K[0] * data_range) ** 2
    c2 = (K[1] * data_range) ** 2
    X = X.astype(jnp.float32)
    Y = Y.astype(jnp.float32)

    def gfilter(img):  # (B, C, H, W), valid separable conv
        H = img.shape[2]
        out = sum(win[k] * img[:, :, k:k + H - win_size + 1, :]
                  for k in range(win_size))
        W = out.shape[3]
        out = sum(win[k] * out[:, :, :, k:k + W - win_size + 1]
                  for k in range(win_size))
        return out

    mu1, mu2 = gfilter(X), gfilter(Y)
    s1 = gfilter(X * X) - mu1 ** 2
    s2 = gfilter(Y * Y) - mu2 ** 2
    s12 = gfilter(X * Y) - mu1 * mu2
    cs = (2 * s12 + c2) / (s1 + s2 + c2)
    m = (2 * mu1 * mu2 + c1) / (mu1 ** 2 + mu2 ** 2 + c1) * cs
    return m.reshape(m.shape[0], m.shape[1], -1).mean(-1).mean()


if __name__ == "__main__":
    key = jax.random.PRNGKey(0)
    kx, ky = jax.random.split(key)
    B, C, H, W = 2, 3, 16, 16                         # channel=3 (module default)
    # Mimic TF.to_tensor(...) * 255: values in [0, 255].
    X = jax.random.uniform(kx, (B, C, H, W), jnp.float32) * 255.0
    Y = jax.random.uniform(ky, (B, C, H, W), jnp.float32) * 255.0

    out = jax.block_until_ready(ssim_pallas(X, Y))
    ref = _ssim_reference(X, Y)
    assert np.allclose(np.asarray(out), np.asarray(ref), atol=1e-4), (out, ref)

    print("KERNEL_OK")
</pallas_src>

<mosaic_0001>
module attributes {stable_mosaic.version = 11 : i64} {
  func.func @_ssim_batch_kernel(%arg0: i32, %arg1: memref<1x3x16x16xf32, #tpu.memory_space<vmem>>, %arg2: memref<1x3x16x16xf32, #tpu.memory_space<vmem>>, %arg3: memref<6x16xf32, #tpu.memory_space<vmem>>, %arg4: memref<16x6xf32, #tpu.memory_space<vmem>>, %arg5: memref<1x3x1x1xf32, #tpu.memory_space<vmem>>) attributes {dimension_semantics = [#tpu.dimension_semantics<parallel>], iteration_bounds = array<i64: 2>, scalar_prefetch = 0 : i64, scratch_operands = 0 : i64, tpu.core_type = #tpu.core_type<tc>, window_params = [{transform_indices = @transform_0, window_bounds = array<i64: 1, 3, 16, 16>}, {transform_indices = @transform_1, window_bounds = array<i64: 1, 3, 16, 16>}, {pipeline_mode = #tpu.pipeline_mode<synchronous>, transform_indices = @transform_2, window_bounds = array<i64: 6, 16>}, {pipeline_mode = #tpu.pipeline_mode<synchronous>, transform_indices = @transform_3, window_bounds = array<i64: 16, 6>}, {transform_indices = @transform_4, window_bounds = array<i64: 1, 3, 1, 1>}]} {
    %c0 = arith.constant 0 : index
    %c0_0 = arith.constant 0 : index
    %0 = vector.load %arg3[%c0, %c0_0] : memref<6x16xf32, #tpu.memory_space<vmem>>, vector<6x16xf32>
    %c0_1 = arith.constant 0 : index
    %c0_2 = arith.constant 0 : index
    %1 = vector.load %arg4[%c0_1, %c0_2] : memref<16x6xf32, #tpu.memory_space<vmem>>, vector<16x6xf32>
    %c0_3 = arith.constant 0 : index
    %c0_4 = arith.constant 0 : index
    %c0_5 = arith.constant 0 : index
    %c0_6 = arith.constant 0 : index
    %2 = vector.load %arg1[%c0_3, %c0_4, %c0_5, %c0_6] : memref<1x3x16x16xf32, #tpu.memory_space<vmem>>, vector<1x1x16x16xf32>
    %3 = vector.shape_cast %2 : vector<1x1x16x16xf32> to vector<16x16xf32>
    %c0_7 = arith.constant 0 : index
    %c0_8 = arith.constant 0 : index
    %c0_9 = arith.constant 0 : index
    %c0_10 = arith.constant 0 : index
    %4 = vector.load %arg2[%c0_7, %c0_8, %c0_9, %c0_10] : memref<1x3x16x16xf32, #tpu.memory_space<vmem>>, vector<1x1x16x16xf32>
    %5 = vector.shape_cast %4 : vector<1x1x16x16xf32> to vector<16x16xf32>
    %6 = arith.mulf %3, %3 : vector<16x16xf32>
    %7 = arith.mulf %5, %5 : vector<16x16xf32>
    %8 = arith.mulf %3, %5 : vector<16x16xf32>
    %9 = tpu.concatenate %3, %5, %6, %7, %8 in 0 : vector<16x16xf32>, vector<16x16xf32>, vector<16x16xf32>, vector<16x16xf32>, vector<16x16xf32> -> vector<80x16xf32>
    %cst = arith.constant dense<0.000000e+00> : vector<80x6xf32>
    %10 = tpu.matmul %9, %1, %cst {dimension_numbers = #tpu.dot_dimension_numbers<[1], [0], [0], [1], [0, 0, 1, 1], [], []>} : vector<80x16xf32>, vector<16x6xf32>, vector<80x6xf32> -> vector<80x6xf32>
    %11 = vector.extract_strided_slice %10 {offsets = [0, 0], sizes = [16, 6], strides = [1, 1]} : vector<80x6xf32> to vector<16x6xf32>
    %cst_11 = arith.constant dense<0.000000e+00> : vector<6x6xf32>
    %12 = tpu.matmul %0, %11, %cst_11 {dimension_numbers = #tpu.dot_dimension_numbers<[1], [0], [0], [1], [0, 0, 1, 1], [], []>} : vector<6x16xf32>, vector<16x6xf32>, vector<6x6xf32> -> vector<6x6xf32>
    %13 = vector.extract_strided_slice %10 {offsets = [16, 0], sizes = [16, 6], strides = [1, 1]} : vector<80x6xf32> to vector<16x6xf32>
    %cst_12 = arith.constant dense<0.000000e+00> : vector<6x6xf32>
    %14 = tpu.matmul %0, %13, %cst_12 {dimension_numbers = #tpu.dot_dimension_numbers<[1], [0], [0], [1], [0, 0, 1, 1], [], []>} : vector<6x16xf32>, vector<16x6xf32>, vector<6x6xf32> -> vector<6x6xf32>
    %15 = vector.extract_strided_slice %10 {offsets = [32, 0], sizes = [16, 6], strides = [1, 1]} : vector<80x6xf32> to vector<16x6xf32>
    %cst_13 = arith.constant dense<0.000000e+00> : vector<6x6xf32>
    %16 = tpu.matmul %0, %15, %cst_13 {dimension_numbers = #tpu.dot_dimension_numbers<[1], [0], [0], [1], [0, 0, 1, 1], [], []>} : vector<6x16xf32>, vector<16x6xf32>, vector<6x6xf32> -> vector<6x6xf32>
    %17 = vector.extract_strided_slice %10 {offsets = [48, 0], sizes = [16, 6], strides = [1, 1]} : vector<80x6xf32> to vector<16x6xf32>
    %cst_14 = arith.constant dense<0.000000e+00> : vector<6x6xf32>
    %18 = tpu.matmul %0, %17, %cst_14 {dimension_numbers = #tpu.dot_dimension_numbers<[1], [0], [0], [1], [0, 0, 1, 1], [], []>} : vector<6x16xf32>, vector<16x6xf32>, vector<6x6xf32> -> vector<6x6xf32>
    %19 = vector.extract_strided_slice %10 {offsets = [64, 0], sizes = [16, 6], strides = [1, 1]} : vector<80x6xf32> to vector<16x6xf32>
    %cst_15 = arith.constant dense<0.000000e+00> : vector<6x6xf32>
    %20 = tpu.matmul %0, %19, %cst_15 {dimension_numbers = #tpu.dot_dimension_numbers<[1], [0], [0], [1], [0, 0, 1, 1], [], []>} : vector<6x16xf32>, vector<16x6xf32>, vector<6x6xf32> -> vector<6x6xf32>
    %21 = arith.mulf %12, %12 : vector<6x6xf32>
    %22 = arith.mulf %14, %14 : vector<6x6xf32>
    %23 = arith.mulf %12, %14 : vector<6x6xf32>
    %24 = arith.subf %16, %21 : vector<6x6xf32>
    %25 = arith.subf %18, %22 : vector<6x6xf32>
    %26 = arith.subf %20, %23 : vector<6x6xf32>
    %cst_16 = arith.constant 2.000000e+00 : f32
    %27 = vector.broadcast %cst_16 : f32 to vector<6x6xf32>
    %28 = arith.mulf %27, %26 : vector<6x6xf32>
    %cst_17 = arith.constant 5.852250e+01 : f32
    %29 = vector.broadcast %cst_17 : f32 to vector<6x6xf32>
    %30 = arith.addf %28, %29 : vector<6x6xf32>
    %31 = arith.addf %24, %25 : vector<6x6xf32>
    %cst_18 = arith.constant 5.852250e+01 : f32
    %32 = vector.broadcast %cst_18 : f32 to vector<6x6xf32>
    %33 = arith.addf %31, %32 : vector<6x6xf32>
    %34 = arith.divf %30, %33 : vector<6x6xf32>
    %cst_19 = arith.constant 2.000000e+00 : f32
    %35 = vector.broadcast %cst_19 : f32 to vector<6x6xf32>
    %36 = arith.mulf %35, %23 : vector<6x6xf32>
    %cst_20 = arith.constant 6.502500e+00 : f32
    %37 = vector.broadcast %cst_20 : f32 to vector<6x6xf32>
    %38 = arith.addf %36, %37 : vector<6x6xf32>
    %39 = arith.addf %21, %22 : vector<6x6xf32>
    %cst_21 = arith.constant 6.502500e+00 : f32
    %40 = vector.broadcast %cst_21 : f32 to vector<6x6xf32>
    %41 = arith.addf %39, %40 : vector<6x6xf32>
    %42 = arith.divf %38, %41 : vector<6x6xf32>
    %43 = arith.mulf %42, %34 : vector<6x6xf32>
    %cst_22 = arith.constant dense<0.000000e+00> : vector<6xf32>
    %44 = vector.multi_reduction <add>, %43, %cst_22 [1] : vector<6x6xf32> to vector<6xf32>
    %45 = vector.shape_cast %44 : vector<6xf32> to vector<6x1xf32>
    %cst_23 = arith.constant dense<0.000000e+00> : vector<1xf32>
    %46 = vector.multi_reduction <add>, %45, %cst_23 [0] : vector<6x1xf32> to vector<1xf32>
    %47 = vector.shape_cast %46 : vector<1xf32> to vector<1x1xf32>
    %cst_24 = arith.constant 0.027777778 : f32
    %48 = vector.broadcast %cst_24 : f32 to vector<1x1xf32>
    %49 = arith.mulf %47, %48 : vector<1x1xf32>
    %c0_25 = arith.constant 0 : index
    %c0_26 = arith.constant 0 : index
    %c0_27 = arith.constant 0 : index
    %c0_28 = arith.constant 0 : index
    %50 = vector.load %arg5[%c0_25, %c0_26, %c0_27, %c0_28] : memref<1x3x1x1xf32, #tpu.memory_space<vmem>>, vector<1x1x1x1xf32>
    %51 = vector.shape_cast %50 : vector<1x1x1x1xf32> to vector<1x1xf32>
    %52 = vector.shape_cast %49 : vector<1x1xf32> to vector<1x1x1x1xf32>
    tpu.vector_store %arg5[%c0_25, %c0_26, %c0_27, %c0_28], %52 {strides = array<i32>} : memref<1x3x1x1xf32, #tpu.memory_space<vmem>>, vector<1x1x1x1xf32>,
    %c0_29 = arith.constant 0 : index
    %c1 = arith.constant 1 : index
    %c0_30 = arith.constant 0 : index
    %c0_31 = arith.constant 0 : index
    %53 = vector.load %arg1[%c0_29, %c1, %c0_30, %c0_31] : memref<1x3x16x16xf32, #tpu.memory_space<vmem>>, vector<1x1x16x16xf32>
    %54 = vector.shape_cast %53 : vector<1x1x16x16xf32> to vector<16x16xf32>
    %c0_32 = arith.constant 0 : index
    %c1_33 = arith.constant 1 : index
    %c0_34 = arith.constant 0 : index
    %c0_35 = arith.constant 0 : index
    %55 = vector.load %arg2[%c0_32, %c1_33, %c0_34, %c0_35] : memref<1x3x16x16xf32, #tpu.memory_space<vmem>>, vector<1x1x16x16xf32>
    %56 = vector.shape_cast %55 : vector<1x1x16x16xf32> to vector<16x16xf32>
    %57 = arith.mulf %54, %54 : vector<16x16xf32>
    %58 = arith.mulf %56, %56 : vector<16x16xf32>
    %59 = arith.mulf %54, %56 : vector<16x16xf32>
    %60 = tpu.concatenate %54, %56, %57, %58, %59 in 0 : vector<16x16xf32>, vector<16x16xf32>, vector<16x16xf32>, vector<16x16xf32>, vector<16x16xf32> -> vector<80x16xf32>
    %cst_36 = arith.constant dense<0.000000e+00> : vector<80x6xf32>
    %61 = tpu.matmul %60, %1, %cst_36 {dimension_numbers = #tpu.dot_dimension_numbers<[1], [0], [0], [1], [0, 0, 1, 1], [], []>} : vector<80x16xf32>, vector<16x6xf32>, vector<80x6xf32> -> vector<80x6xf32>
    %62 = vector.extract_strided_slice %61 {offsets = [0, 0], sizes = [16, 6], strides = [1, 1]} : vector<80x6xf32> to vector<16x6xf32>
    %cst_37 = arith.constant dense<0.000000e+00> : vector<6x6xf32>
    %63 = tpu.matmul %0, %62, %cst_37 {dimension_numbers = #tpu.dot_dimension_numbers<[1], [0], [0], [1], [0, 0, 1, 1], [], []>} : vector<6x16xf32>, vector<16x6xf32>, vector<6x6xf32> -> vector<6x6xf32>
    %64 = vector.extract_strided_slice %61 {offsets = [16, 0], sizes = [16, 6], strides = [1, 1]} : vector<80x6xf32> to vector<16x6xf32>
    %cst_38 = arith.constant dense<0.000000e+00> : vector<6x6xf32>
    %65 = tpu.matmul %0, %64, %cst_38 {dimension_numbers = #tpu.dot_dimension_numbers<[1], [0], [0], [1], [0, 0, 1, 1], [], []>} : vector<6x16xf32>, vector<16x6xf32>, vector<6x6xf32> -> vector<6x6xf32>
    %66 = vector.extract_strided_slice %61 {offsets = [32, 0], sizes = [16, 6], strides = [1, 1]} : vector<80x6xf32> to vector<16x6xf32>
    %cst_39 = arith.constant dense<0.000000e+00> : vector<6x6xf32>
    %67 = tpu.matmul %0, %66, %cst_39 {dimension_numbers = #tpu.dot_dimension_numbers<[1], [0], [0], [1], [0, 0, 1, 1], [], []>} : vector<6x16xf32>, vector<16x6xf32>, vector<6x6xf32> -> vector<6x6xf32>
    %68 = vector.extract_strided_slice %61 {offsets = [48, 0], sizes = [16, 6], strides = [1, 1]} : vector<80x6xf32> to vector<16x6xf32>
    %cst_40 = arith.constant dense<0.000000e+00> : vector<6x6xf32>
    %69 = tpu.matmul %0, %68, %cst_40 {dimension_numbers = #tpu.dot_dimension_numbers<[1], [0], [0], [1], [0, 0, 1, 1], [], []>} : vector<6x16xf32>, vector<16x6xf32>, vector<6x6xf32> -> vector<6x6xf32>
    %70 = vector.extract_strided_slice %61 {offsets = [64, 0], sizes = [16, 6], strides = [1, 1]} : vector<80x6xf32> to vector<16x6xf32>
    %cst_41 = arith.constant dense<0.000000e+00> : vector<6x6xf32>
    %71 = tpu.matmul %0, %70, %cst_41 {dimension_numbers = #tpu.dot_dimension_numbers<[1], [0], [0], [1], [0, 0, 1, 1], [], []>} : vector<6x16xf32>, vector<16x6xf32>, vector<6x6xf32> -> vector<6x6xf32>
    %72 = arith.mulf %63, %63 : vector<6x6xf32>
    %73 = arith.mulf %65, %65 : vector<6x6xf32>
    %74 = arith.mulf %63, %65 : vector<6x6xf32>
    %75 = arith.subf %67, %72 : vector<6x6xf32>
    %76 = arith.subf %69, %73 : vector<6x6xf32>
    %77 = arith.subf %71, %74 : vector<6x6xf32>
    %cst_42 = arith.constant 2.000000e+00 : f32
    %78 = vector.broadcast %cst_42 : f32 to vector<6x6xf32>
    %79 = arith.mulf %78, %77 : vector<6x6xf32>
    %cst_43 = arith.constant 5.852250e+01 : f32
    %80 = vector.broadcast %cst_43 : f32 to vector<6x6xf32>
    %81 = arith.addf %79, %80 : vector<6x6xf32>
    %82 = arith.addf %75, %76 : vector<6x6xf32>
    %cst_44 = arith.constant 5.852250e+01 : f32
    %83 = vector.broadcast %cst_44 : f32 to vector<6x6xf32>
    %84 = arith.addf %82, %83 : vector<6x6xf32>
    %85 = arith.divf %81, %84 : vector<6x6xf32>
    %cst_45 = arith.constant 2.000000e+00 : f32
    %86 = vector.broadcast %cst_45 : f32 to vector<6x6xf32>
    %87 = arith.mulf %86, %74 : vector<6x6xf32>
    %cst_46 = arith.constant 6.502500e+00 : f32
    %88 = vector.broadcast %cst_46 : f32 to vector<6x6xf32>
    %89 = arith.addf %87, %88 : vector<6x6xf32>
    %90 = arith.addf %72, %73 : vector<6x6xf32>
    %cst_47 = arith.constant 6.502500e+00 : f32
    %91 = vector.broadcast %cst_47 : f32 to vector<6x6xf32>
    %92 = arith.addf %90, %91 : vector<6x6xf32>
    %93 = arith.divf %89, %92 : vector<6x6xf32>
    %94 = arith.mulf %93, %85 : vector<6x6xf32>
    %cst_48 = arith.constant dense<0.000000e+00> : vector<6xf32>
    %95 = vector.multi_reduction <add>, %94, %cst_48 [1] : vector<6x6xf32> to vector<6xf32>
    %96 = vector.shape_cast %95 : vector<6xf32> to vector<6x1xf32>
    %cst_49 = arith.constant dense<0.000000e+00> : vector<1xf32>
    %97 = vector.multi_reduction <add>, %96, %cst_49 [0] : vector<6x1xf32> to vector<1xf32>
    %98 = vector.shape_cast %97 : vector<1xf32> to vector<1x1xf32>
    %cst_50 = arith.constant 0.027777778 : f32
    %99 = vector.broadcast %cst_50 : f32 to vector<1x1xf32>
    %100 = arith.mulf %98, %99 : vector<1x1xf32>
    %c0_51 = arith.constant 0 : index
    %c1_52 = arith.constant 1 : index
    %c0_53 = arith.constant 0 : index
    %c0_54 = arith.constant 0 : index
    %101 = vector.load %arg5[%c0_51, %c1_52, %c0_53, %c0_54] : memref<1x3x1x1xf32, #tpu.memory_space<vmem>>, vector<1x1x1x1xf32>
    %102 = vector.shape_cast %101 : vector<1x1x1x1xf32> to vector<1x1xf32>
    %103 = vector.shape_cast %100 : vector<1x1xf32> to vector<1x1x1x1xf32>
    tpu.vector_store %arg5[%c0_51, %c1_52, %c0_53, %c0_54], %103 {strides = array<i32>} : memref<1x3x1x1xf32, #tpu.memory_space<vmem>>, vector<1x1x1x1xf32>,
    %c0_55 = arith.constant 0 : index
    %c2 = arith.constant 2 : index
    %c0_56 = arith.constant 0 : index
    %c0_57 = arith.constant 0 : index
    %104 = vector.load %arg1[%c0_55, %c2, %c0_56, %c0_57] : memref<1x3x16x16xf32, #tpu.memory_space<vmem>>, vector<1x1x16x16xf32>
    %105 = vector.shape_cast %104 : vector<1x1x16x16xf32> to vector<16x16xf32>
    %c0_58 = arith.constant 0 : index
    %c2_59 = arith.constant 2 : index
    %c0_60 = arith.constant 0 : index
    %c0_61 = arith.constant 0 : index
    %106 = vector.load %arg2[%c0_58, %c2_59, %c0_60, %c0_61] : memref<1x3x16x16xf32, #tpu.memory_space<vmem>>, vector<1x1x16x16xf32>
    %107 = vector.shape_cast %106 : vector<1x1x16x16xf32> to vector<16x16xf32>
    %108 = arith.mulf %105, %105 : vector<16x16xf32>
    %109 = arith.mulf %107, %107 : vector<16x16xf32>
    %110 = arith.mulf %105, %107 : vector<16x16xf32>
    %111 = tpu.concatenate %105, %107, %108, %109, %110 in 0 : vector<16x16xf32>, vector<16x16xf32>, vector<16x16xf32>, vector<16x16xf32>, vector<16x16xf32> -> vector<80x16xf32>
    %cst_62 = arith.constant dense<0.000000e+00> : vector<80x6xf32>
    %112 = tpu.matmul %111, %1, %cst_62 {dimension_numbers = #tpu.dot_dimension_numbers<[1], [0], [0], [1], [0, 0, 1, 1], [], []>} : vector<80x16xf32>, vector<16x6xf32>, vector<80x6xf32> -> vector<80x6xf32>
    %113 = vector.extract_strided_slice %112 {offsets = [0, 0], sizes = [16, 6], strides = [1, 1]} : vector<80x6xf32> to vector<16x6xf32>
    %cst_63 = arith.constant dense<0.000000e+00> : vector<6x6xf32>
    %114 = tpu.matmul %0, %113, %cst_63 {dimension_numbers = #tpu.dot_dimension_numbers<[1], [0], [0], [1], [0, 0, 1, 1], [], []>} : vector<6x16xf32>, vector<16x6xf32>, vector<6x6xf32> -> vector<6x6xf32>
    %115 = vector.extract_strided_slice %112 {offsets = [16, 0], sizes = [16, 6], strides = [1, 1]} : vector<80x6xf32> to vector<16x6xf32>
    %cst_64 = arith.constant dense<0.000000e+00> : vector<6x6xf32>
    %116 = tpu.matmul %0, %115, %cst_64 {dimension_numbers = #tpu.dot_dimension_numbers<[1], [0], [0], [1], [0, 0, 1, 1], [], []>} : vector<6x16xf32>, vector<16x6xf32>, vector<6x6xf32> -> vector<6x6xf32>
    %117 = vector.extract_strided_slice %112 {offsets = [32, 0], sizes = [16, 6], strides = [1, 1]} : vector<80x6xf32> to vector<16x6xf32>
    %cst_65 = arith.constant dense<0.000000e+00> : vector<6x6xf32>
    %118 = tpu.matmul %0, %117, %cst_65 {dimension_numbers = #tpu.dot_dimension_numbers<[1], [0], [0], [1], [0, 0, 1, 1], [], []>} : vector<6x16xf32>, vector<16x6xf32>, vector<6x6xf32> -> vector<6x6xf32>
    %119 = vector.extract_strided_slice %112 {offsets = [48, 0], sizes = [16, 6], strides = [1, 1]} : vector<80x6xf32> to vector<16x6xf32>
    %cst_66 = arith.constant dense<0.000000e+00> : vector<6x6xf32>
    %120 = tpu.matmul %0, %119, %cst_66 {dimension_numbers = #tpu.dot_dimension_numbers<[1], [0], [0], [1], [0, 0, 1, 1], [], []>} : vector<6x16xf32>, vector<16x6xf32>, vector<6x6xf32> -> vector<6x6xf32>
    %121 = vector.extract_strided_slice %112 {offsets = [64, 0], sizes = [16, 6], strides = [1, 1]} : vector<80x6xf32> to vector<16x6xf32>
    %cst_67 = arith.constant dense<0.000000e+00> : vector<6x6xf32>
    %122 = tpu.matmul %0, %121, %cst_67 {dimension_numbers = #tpu.dot_dimension_numbers<[1], [0], [0], [1], [0, 0, 1, 1], [], []>} : vector<6x16xf32>, vector<16x6xf32>, vector<6x6xf32> -> vector<6x6xf32>
    %123 = arith.mulf %114, %114 : vector<6x6xf32>
    %124 = arith.mulf %116, %116 : vector<6x6xf32>
    %125 = arith.mulf %114, %116 : vector<6x6xf32>
    %126 = arith.subf %118, %123 : vector<6x6xf32>
    %127 = arith.subf %120, %124 : vector<6x6xf32>
    %128 = arith.subf %122, %125 : vector<6x6xf32>
    %cst_68 = arith.constant 2.000000e+00 : f32
    %129 = vector.broadcast %cst_68 : f32 to vector<6x6xf32>
    %130 = arith.mulf %129, %128 : vector<6x6xf32>
    %cst_69 = arith.constant 5.852250e+01 : f32
    %131 = vector.broadcast %cst_69 : f32 to vector<6x6xf32>
    %132 = arith.addf %130, %131 : vector<6x6xf32>
    %133 = arith.addf %126, %127 : vector<6x6xf32>
    %cst_70 = arith.constant 5.852250e+01 : f32
    %134 = vector.broadcast %cst_70 : f32 to vector<6x6xf32>
    %135 = arith.addf %133, %134 : vector<6x6xf32>
    %136 = arith.divf %132, %135 : vector<6x6xf32>
    %cst_71 = arith.constant 2.000000e+00 : f32
    %137 = vector.broadcast %cst_71 : f32 to vector<6x6xf32>
    %138 = arith.mulf %137, %125 : vector<6x6xf32>
    %cst_72 = arith.constant 6.502500e+00 : f32
    %139 = vector.broadcast %cst_72 : f32 to vector<6x6xf32>
    %140 = arith.addf %138, %139 : vector<6x6xf32>
    %141 = arith.addf %123, %124 : vector<6x6xf32>
    %cst_73 = arith.constant 6.502500e+00 : f32
    %142 = vector.broadcast %cst_73 : f32 to vector<6x6xf32>
    %143 = arith.addf %141, %142 : vector<6x6xf32>
    %144 = arith.divf %140, %143 : vector<6x6xf32>
    %145 = arith.mulf %144, %136 : vector<6x6xf32>
    %cst_74 = arith.constant dense<0.000000e+00> : vector<6xf32>
    %146 = vector.multi_reduction <add>, %145, %cst_74 [1] : vector<6x6xf32> to vector<6xf32>
    %147 = vector.shape_cast %146 : vector<6xf32> to vector<6x1xf32>
    %cst_75 = arith.constant dense<0.000000e+00> : vector<1xf32>
    %148 = vector.multi_reduction <add>, %147, %cst_75 [0] : vector<6x1xf32> to vector<1xf32>
    %149 = vector.shape_cast %148 : vector<1xf32> to vector<1x1xf32>
    %cst_76 = arith.constant 0.027777778 : f32
    %150 = vector.broadcast %cst_76 : f32 to vector<1x1xf32>
    %151 = arith.mulf %149, %150 : vector<1x1xf32>
    %c0_77 = arith.constant 0 : index
    %c2_78 = arith.constant 2 : index
    %c0_79 = arith.constant 0 : index
    %c0_80 = arith.constant 0 : index
    %152 = vector.load %arg5[%c0_77, %c2_78, %c0_79, %c0_80] : memref<1x3x1x1xf32, #tpu.memory_space<vmem>>, vector<1x1x1x1xf32>
    %153 = vector.shape_cast %152 : vector<1x1x1x1xf32> to vector<1x1xf32>
    %154 = vector.shape_cast %151 : vector<1x1xf32> to vector<1x1x1x1xf32>
    tpu.vector_store %arg5[%c0_77, %c2_78, %c0_79, %c0_80], %154 {strides = array<i32>} : memref<1x3x1x1xf32, #tpu.memory_space<vmem>>, vector<1x1x1x1xf32>,
    return
  }
  func.func @transform_0(%arg0: i32) -> (i32, i32, i32, i32) {
    %c0_i32 = arith.constant 0 : i32
    %c0_i32_0 = arith.constant 0 : i32
    %c0_i32_1 = arith.constant 0 : i32
    %c0_i32_2 = arith.constant 0 : i32
    return %arg0, %c0_i32, %c0_i32_0, %c0_i32_1 : i32, i32, i32, i32
  }
  func.func @transform_1(%arg0: i32) -> (i32, i32, i32, i32) {
    %c0_i32 = arith.constant 0 : i32
    %c0_i32_0 = arith.constant 0 : i32
    %c0_i32_1 = arith.constant 0 : i32
    %c0_i32_2 = arith.constant 0 : i32
    return %arg0, %c0_i32, %c0_i32_0, %c0_i32_1 : i32, i32, i32, i32
  }
  func.func @transform_2(%arg0: i32) -> (i32, i32) {
    %c0_i32 = arith.constant 0 : i32
    %c0_i32_0 = arith.constant 0 : i32
    %c0_i32_1 = arith.constant 0 : i32
    return %c0_i32, %c0_i32_0 : i32, i32
  }
  func.func @transform_3(%arg0: i32) -> (i32, i32) {
    %c0_i32 = arith.constant 0 : i32
    %c0_i32_0 = arith.constant 0 : i32
    %c0_i32_1 = arith.constant 0 : i32
    return %c0_i32, %c0_i32_0 : i32, i32
  }
  func.func @transform_4(%arg0: i32) -> (i32, i32, i32, i32) {
    %c0_i32 = arith.constant 0 : i32
    %c0_i32_0 = arith.constant 0 : i32
    %c0_i32_1 = arith.constant 0 : i32
    %c0_i32_2 = arith.constant 0 : i32
    return %arg0, %c0_i32, %c0_i32_0, %c0_i32_1 : i32, i32, i32, i32
  }
}

</mosaic_0001>

<llo_original>
// kernel: tpu_custom_call.1
$region0: #{tpu_custom_call.1}
  #allocation0 [shape = 'u32[]', space=smem, size = 0x4, offset = 0x4, fixed_abs, tag = 'smem constant byte address 0x4 - core index']
  #allocation1 [shape = 'u32[144,128]{1,0:T(1,128)}', space=vmem, size = 0x12000, scoped, tag = 'internal scratch']
  %s0 = inlined_call_operand.hbm [shape: f32[2,3,16,16], index: 0, kind: input, shape index: {}]
  %s1 = inlined_call_operand.hbm [shape: f32[2,3,16,16], index: 1, kind: input, shape index: {}]
  %s2 = inlined_call_operand.vmem [shape: f32[6,16], index: 2, kind: input, shape index: {}]
  %s3 = inlined_call_operand.vmem [shape: f32[16,6], index: 3, kind: input, shape index: {}]
  %s4 = inlined_call_operand.vmem [shape: f32[2,3,1,1], index: 4, kind: output, shape index: {}]
  %s5 = sld [smem:[#allocation0]]
  $region57: #{tpu_custom_call.1} parent=0
    _
  %s7 = ssub.s32 1, %s5
  %s8 = scalar_select 0, %s7, %s5
  $region1: #{tpu_custom_call.1} parent=0
    #allocation2 [shape = 'u8[49152]{0}', space=vmem, size = 0xc000, scoped, tag = 'input window, operand 0']
    #allocation3 [shape = 's32[2]{0}', space=sflag, size = 0x8, scoped, tag = 'scoped memory for tpu_custom_call.1']
    #allocation4 [shape = 'u8[49152]{0}', space=vmem, size = 0xc000, scoped, tag = 'input window, operand 1']
    #allocation5 [shape = 's32[2]{0}', space=sflag, size = 0x8, scoped, tag = 'scoped memory for tpu_custom_call.1']
    %9 = vsyncpa [#allocation3], 0
    %s10 = scalar_lea.sflag [#allocation3], 1
    %11 = vsyncpa %s10, 0
    %12 = vsyncpa [#allocation5], 0
    %s13 = scalar_lea.sflag [#allocation5], 1
    %14 = vsyncpa %s13, 0
    loop: start=0, step=1, limit=4
    $region2: #{tpu_custom_call.1} parent=1 // loop_pre_header
      _
    $region3: #{tpu_custom_call.1} parent=1 // loop_header
      %s16 = sphi 0, %s20
      %p17 = scmp.ge.s32.totalorder %s16, 4
      %s26 = sphi 0, %s28
      %s29 = sphi 0, %s26
      %s30 = sphi 0, %s29
      %s46 = sphi 0, %s30
      %s52 = sphi 0, %s54
      %s55 = sphi 0, %s52
      %s56 = sphi 0, %s55
      %s72 = sphi 0, %s56
      %s76 = sphi 0, %s76
      %s78 = sphi 0, %s76
      %s79 = sphi 0, %s78
      %s93 = sphi 0, %s79
      %s97 = sphi 0, %s97
      %s99 = sphi 0, %s97
      %s100 = sphi 0, %s99
      %s114 = sphi 0, %s100
      %s120 = sphi 0, %s122
      %s123 = sphi 0, %s120
      %s124 = sphi 0, %s123
      %s140 = sphi 0, %s124
    $region4: #{tpu_custom_call.1} parent=1 // loop_header_branch
      %19 = sbr.rel (%p17) target = $region8
    $region5: #{tpu_custom_call.1} parent=1 // loop_body
      %s21 = ssub.s32 %s16, 1
      %s22 = ssub.s32 %s16, 2
      %s23 = sadd.s32 %s16, 1
      %s24 = ssub.s32 %s16, %s23
      %p25 = scmp.eq.s32.totalorder %s24, 0
      %s27 = sadd.s32 %s26, 1
      %s28 = scalar_select %p25, %s26, %s27
      %p31 = pneg %p25
      %p32 = scmp.eq.s32.totalorder %s16, 1
      %p33 = por %p31, %p32
      %p34 = scmp.ne.s32.totalorder %s26, %s29
      %p35 = scmp.eq.s32.totalorder %s16, 0
      %p36 = por %p34, %p35
      %p37 = scmp.ne.s32.totalorder %s26, %s29
      %p38 = scmp.eq.s32.totalorder %s21, 1
      %p39 = por %p37, %p38
      %p40 = scmp.ne.s32.totalorder %s29, %s30
      %p41 = scmp.eq.s32.totalorder %s21, 0
      %p42 = por %p40, %p41
      %p43 = scmp.ne.s32.totalorder %s29, %s30
      %p44 = scmp.eq.s32.totalorder %s22, 1
      %p45 = por %p43, %p44
      %p47 = scmp.ne.s32.totalorder %s30, %s46
      %p48 = scmp.eq.s32.totalorder %s22, 0
      %p49 = por %p47, %p48
      %s50 = ssub.s32 %s16, %s23
      %p51 = scmp.eq.s32.totalorder %s50, 0
      %s53 = sadd.s32 %s52, 1
      %s54 = scalar_select %p51, %s52, %s53
      %p57 = pneg %p51
      %p58 = scmp.eq.s32.totalorder %s16, 1
      %p59 = por %p57, %p58
      %p60 = scmp.ne.s32.totalorder %s52, %s55
      %p61 = scmp.eq.s32.totalorder %s16, 0
      %p62 = por %p60, %p61
      %p63 = scmp.ne.s32.totalorder %s52, %s55
      %p64 = scmp.eq.s32.totalorder %s21, 1
      %p65 = por %p63, %p64
      %p66 = scmp.ne.s32.totalorder %s55, %s56
      %p67 = scmp.eq.s32.totalorder %s21, 0
      %p68 = por %p66, %p67
      %p69 = scmp.ne.s32.totalorder %s55, %s56
      %p70 = scmp.eq.s32.totalorder %s22, 1
      %p71 = por %p69, %p70
      %p73 = scmp.ne.s32.totalorder %s56, %s72
      %p74 = scmp.eq.s32.totalorder %s22, 0
      %p75 = por %p73, %p74
      %s77 = sadd.s32 %s76, 1
      %p80 = scmp.eq.s32.totalorder %s16, 1
      %p81 = scmp.ne.s32.totalorder %s76, %s78
      %p82 = scmp.eq.s32.totalorder %s16, 0
      %p83 = por %p81, %p82
      %p84 = scmp.ne.s32.totalorder %s76, %s78
      %p85 = scmp.eq.s32.totalorder %s21, 1
      %p86 = por %p84, %p85
      %p87 = scmp.ne.s32.totalorder %s78, %s79
      %p88 = scmp.eq.s32.totalorder %s21, 0
      %p89 = por %p87, %p88
      %p90 = scmp.ne.s32.totalorder %s78, %s79
      %p91 = scmp.eq.s32.totalorder %s22, 1
      %p92 = por %p90, %p91
      %p94 = scmp.ne.s32.totalorder %s79, %s93
      %p95 = scmp.eq.s32.totalorder %s22, 0
      %p96 = por %p94, %p95
      %s98 = sadd.s32 %s97, 1
      %p101 = scmp.eq.s32.totalorder %s16, 1
      %p102 = scmp.ne.s32.totalorder %s97, %s99
      %p103 = scmp.eq.s32.totalorder %s16, 0
      %p104 = por %p102, %p103
      %p105 = scmp.ne.s32.totalorder %s97, %s99
      %p106 = scmp.eq.s32.totalorder %s21, 1
      %p107 = por %p105, %p106
      %p108 = scmp.ne.s32.totalorder %s99, %s100
      %p109 = scmp.eq.s32.totalorder %s21, 0
      %p110 = por %p108, %p109
      %p111 = scmp.ne.s32.totalorder %s99, %s100
      %p112 = scmp.eq.s32.totalorder %s22, 1
      %p113 = por %p111, %p112
      %p115 = scmp.ne.s32.totalorder %s100, %s114
      %p116 = scmp.eq.s32.totalorder %s22, 0
      %p117 = por %p115, %p116
      %s118 = ssub.s32 %s16, %s23
      %p119 = scmp.eq.s32.totalorder %s118, 0
      %s121 = sadd.s32 %s120, 1
      %s122 = scalar_select %p119, %s120, %s121
      %p125 = pneg %p119
      %p126 = scmp.eq.s32.totalorder %s16, 1
      %p127 = por %p125, %p126
      %p128 = scmp.ne.s32.totalorder %s120, %s123
      %p129 = scmp.eq.s32.totalorder %s16, 0
      %p130 = por %p128, %p129
      %p131 = scmp.ne.s32.totalorder %s120, %s123
      %p132 = scmp.eq.s32.totalorder %s21, 1
      %p133 = por %p131, %p132
      %p134 = scmp.ne.s32.totalorder %s123, %s124
      %p135 = scmp.eq.s32.totalorder %s21, 0
      %p136 = por %p134, %p135
      %p137 = scmp.ne.s32.totalorder %s123, %s124
      %p138 = scmp.eq.s32.totalorder %s22, 1
      %p139 = por %p137, %p138
      %p141 = scmp.ne.s32.totalorder %s124, %s140
      %p142 = scmp.eq.s32.totalorder %s22, 0
      %p143 = por %p141, %p142
      %p144 = scmp.le.s32.totalorder 1, %s16
      %p145 = scmp.lt.s32.totalorder %s16, 3
      %p146 = pnand %p144, %p145
      %p147 = pneg %p146
      // Predicated region
      $region9: #{tpu_custom_call.1} parent=5 // pred_check
        _
      $region10: #{tpu_custom_call.1} parent=5 // pred_check_branch
        %149 = sbr.rel (%p146) target = $region12
      $region11: #{tpu_custom_call.1} parent=5 // pred_region
        %s150 = ssub.s32 %s16, 1
        // Predicated region
        $region13: #{tpu_custom_call.1} parent=11 // pred_check
          %p151 = pneg %p89
        $region14: #{tpu_custom_call.1} parent=11 // pred_check_branch
          %153 = sbr.rel (%p151) target = $region16
        $region15: #{tpu_custom_call.1} parent=11 // pred_region
          _
        $region16: #{tpu_custom_call.1} parent=11 // pred_fallthru
          _
        // Predicated region
        $region17: #{tpu_custom_call.1} parent=11 // pred_check
          %p154 = pneg %p110
        $region18: #{tpu_custom_call.1} parent=11 // pred_check_branch
          %156 = sbr.rel (%p154) target = $region20
        $region19: #{tpu_custom_call.1} parent=11 // pred_region
          _
        $region20: #{tpu_custom_call.1} parent=11 // pred_fallthru
          _
      $region12: #{tpu_custom_call.1} parent=5 // pred_fallthru
        _
      %p157 = scmp.lt.s32.totalorder %s16, 2
      // Predicated region
      $region21: #{tpu_custom_call.1} parent=5 // pred_check
        %p158 = pneg %p157
      $region22: #{tpu_custom_call.1} parent=5 // pred_check_branch
        %160 = sbr.rel (%p158) target = $region24
      $region23: #{tpu_custom_call.1} parent=5 // pred_region
        // Predicated region
        $region25: #{tpu_custom_call.1} parent=23 // pred_check
          %p161 = pneg %p36
        $region26: #{tpu_custom_call.1} parent=23 // pred_check_branch
          %163 = sbr.rel (%p161) target = $region28
        $region27: #{tpu_custom_call.1} parent=23 // pred_region
          %s164 = sand.u32 %s26, 1
          %s165 = scalar_lea.sflag [#allocation3], %s164
          %s166 = sand.u32 %s26, 1
          %s167 = smul.addr %s166, 48
          %s168 = scalar_lea.vmem [#allocation2], %s167
          %s170 = ssub.s32 768, 768
          %171 = vsyncadd %s165, %s170
          %s172 = smul.addr %s16, 6
          %s173 = smul.addr %s172, 128
          %s174 = scalar_lea.hbm %s0, %s173
          %s175 = sshll.u32 %s168, 4
          %s176 = int_to_ptr.vmem [resolvable:$true] %s175
          %181 = dma.hbm_to_vmem [thread:$0]  %s174, 768, %s176, %s165, 128, 128, 8
        $region28: #{tpu_custom_call.1} parent=23 // pred_fallthru
          _
        // Predicated region
        $region29: #{tpu_custom_call.1} parent=23 // pred_check
          %p182 = pneg %p62
        $region30: #{tpu_custom_call.1} parent=23 // pred_check_branch
          %184 = sbr.rel (%p182) target = $region32
        $region31: #{tpu_custom_call.1} parent=23 // pred_region
          %s185 = sand.u32 %s52, 1
          %s186 = scalar_lea.sflag [#allocation5], %s185
          %s187 = sand.u32 %s52, 1
          %s188 = smul.addr %s187, 48
          %s189 = scalar_lea.vmem [#allocation4], %s188
          %s191 = ssub.s32 768, 768
          %192 = vsyncadd %s186, %s191
          %s193 = smul.addr %s16, 6
          %s194 = smul.addr %s193, 128
          %s195 = scalar_lea.hbm %s1, %s194
          %s196 = sshll.u32 %s189, 4
          %s197 = int_to_ptr.vmem [resolvable:$true] %s196
          %202 = dma.hbm_to_vmem [thread:$0]  %s195, 768, %s197, %s186, 128, 128, 8
        $region32: #{tpu_custom_call.1} parent=23 // pred_fallthru
          _
      $region24: #{tpu_custom_call.1} parent=5 // pred_fallthru
        _
      %p203 = scmp.le.s32.totalorder 1, %s16
      %p204 = scmp.lt.s32.totalorder %s16, 3
      %p205 = pnand %p203, %p204
      %p206 = pneg %p205
      // Predicated region
      $region33: #{tpu_custom_call.1} parent=5 // pred_check
        _
      $region34: #{tpu_custom_call.1} parent=5 // pred_check_branch
        %208 = sbr.rel (%p205) target = $region36
      $region35: #{tpu_custom_call.1} parent=5 // pred_region
        %s209 = ssub.s32 %s16, 1
        %s210 = sand.u32 %s29, 1
        %s211 = scalar_lea.sflag [#allocation3], %s210
        %s212 = sand.u32 %s29, 1
        %s213 = smul.addr %s212, 48
        %s214 = scalar_lea.vmem [#allocation2], %s213
        // Predicated region
        $region37: #{tpu_custom_call.1} parent=35 // pred_check
          %p215 = pneg %p42
        $region38: #{tpu_custom_call.1} parent=35 // pred_check_branch
          %217 = sbr.rel (%p215) target = $region40
        $region39: #{tpu_custom_call.1} parent=35 // pred_region
          %218 = dma.done %s211, 768
        $region40: #{tpu_custom_call.1} parent=35 // pred_fallthru
          _
        %s219 = sand.u32 %s55, 1
        %s220 = scalar_lea.sflag [#allocation5], %s219
        %s221 = sand.u32 %s55, 1
        %s222 = smul.addr %s221, 48
        %s223 = scalar_lea.vmem [#allocation4], %s222
        // Predicated region
        $region41: #{tpu_custom_call.1} parent=35 // pred_check
          %p224 = pneg %p68
        $region42: #{tpu_custom_call.1} parent=35 // pred_check_branch
          %226 = sbr.rel (%p224) target = $region44
        $region43: #{tpu_custom_call.1} parent=35 // pred_region
          %227 = dma.done %s220, 768
        $region44: #{tpu_custom_call.1} parent=35 // pred_fallthru
          _
        %s228 = sand.u32 %s29, 1
        %s229 = scalar_lea.sflag [#allocation3], %s228
        %s230 = sand.u32 %s29, 1
        %s231 = smul.addr %s230, 48
        %s232 = scalar_lea.vmem [#allocation2], %s231
        %p233 = pneg %p42
        %p234 = pneg %p39
        %s235 = sand.u32 %s55, 1
        %s236 = scalar_lea.sflag [#allocation5], %s235
        %s237 = sand.u32 %s55, 1
        %s238 = smul.addr %s237, 48
        %s239 = scalar_lea.vmem [#allocation4], %s238
        %p240 = pneg %p68
        %p241 = pneg %p65
        %p242 = pneg %p89
        %p243 = pneg %p86
        %p244 = pneg %p110
        %p245 = pneg %p107
        %p246 = pneg %p136
        %p247 = pneg %p133
        %p248 = scmp.lt.s32.totalorder %s21, 1
        %s249 = scalar_select %p248, %s21, 1
        %s250 = smul.addr %s249, 3
        %s251 = scalar_lea.vmem %s4, %s250
        %p252 = scmp.lt.s32.totalorder %s21, 1
        %s253 = scalar_select %p252, %s21, 1
        %s254 = smul.addr %s253, 3
        %s255 = scalar_lea.vmem %s4, %s254
        %v256 = vld [vmem:[%s2] sm:$0x3f]
        %v257 = vld [vmem:[%s3] sm:$0xff]
        %v258 = vld [vmem:[%s3 + $0x8] sm:$0xff]
        %v259 = vld [vmem:[%s214] sm:$0xff]
        %v260 = vld [vmem:[%s214 + $0x8] sm:$0xff]
        %v261 = vld [vmem:[%s223] sm:$0xff]
        %v262 = vld [vmem:[%s223 + $0x8] sm:$0xff]
        %v263 = vmul.f32 %v259, %v259
        %v264 = vmul.f32 %v260, %v260
        %v265 = vmul.f32 %v261, %v261
        %v266 = vmul.f32 %v262, %v262
        %v267 = vmul.f32 %v259, %v261
        %v268 = vmul.f32 %v260, %v262
        %vm269 = vcmask 130048
        %v271 = vsel %vm269, %v259, 0
        %v274 = vsel %vm269, %v260, 0
        %v277 = vsel %vm269, %v261, 0
        %v280 = vsel %vm269, %v262, 0
        %v283 = vsel %vm269, %v263, 0
        %v286 = vsel %vm269, %v264, 0
        %v289 = vsel %vm269, %v265, 0
        %v292 = vsel %vm269, %v266, 0
        %v295 = vsel %vm269, %v267, 0
        %v298 = vsel %vm269, %v268, 0
        %300 = vmatprep.subr.mxu0 0.0
        %301 = vmatpush1.msra.mxu0 0.0
        %302 = vmatprep.subr.mxu0 0.0
        %303 = vmatpush1.msra.mxu0 0.0
        %304 = vmatprep.subr.mxu0 0.0
        %305 = vmatpush1.msra.mxu0 0.0
        %306 = vmatprep.subr.mxu0 0.0
        %307 = vmatpush1.msra.mxu0 0.0
        %308 = vmatprep.subr.mxu0 0.0
        %309 = vmatpush1.msra.mxu0 0.0
        %310 = vmatprep.subr.mxu0 0.0
        %311 = vmatpush1.msra.mxu0 0.0
        %312 = vmatprep.subr.mxu0 0.0
        %313 = vmatpush1.msra.mxu0 0.0
        %314 = vmatprep.subr.mxu0 0.0
        %315 = vmatpush1.msra.mxu0 0.0
        %316 = vmatprep.subr.mxu0 0.0
        %317 = vmatpush1.msra.mxu0 0.0
        %318 = vmatprep.subr.mxu0 0.0
        %319 = vmatpush1.msra.mxu0 0.0
        %320 = vmatprep.subr.mxu0 0.0
        %321 = vmatpush1.msra.mxu0 0.0
        %322 = vmatprep.subr.mxu0 0.0
        %323 = vmatpush1.msra.mxu0 0.0
        %324 = vmatprep.subr.mxu0 0.0
        %325 = vmatpush1.msra.mxu0 0.0
        %326 = vmatprep.subr.mxu0 0.0
        %327 = vmatpush1.msra.mxu0 0.0
        %328 = vmatprep.subr.mxu0 0.0
        %329 = vmatpush1.msra.mxu0 %v258
        %330 = vmatprep.subr.mxu0 0.0
        %331 = vmatpush1.msra.mxu0 %v257
        %332 = vmatprep.subr.mxu0 0.0
        %333 = vmatpush2.msra.mxu0 0.0
        %334 = vmatprep.subr.mxu0 0.0
        %335 = vmatpush2.msra.mxu0 0.0
        %336 = vmatprep.subr.mxu0 0.0
        %337 = vmatpush2.msra.mxu0 0.0
        %338 = vmatprep.subr.mxu0 0.0
        %339 = vmatpush2.msra.mxu0 0.0
        %340 = vmatprep.subr.mxu0 0.0
        %341 = vmatpush2.msra.mxu0 0.0
        %342 = vmatprep.subr.mxu0 0.0
        %343 = vmatpush2.msra.mxu0 0.0
        %344 = vmatprep.subr.mxu0 0.0
        %345 = vmatpush2.msra.mxu0 0.0
        %346 = vmatprep.subr.mxu0 0.0
        %347 = vmatpush2.msra.mxu0 0.0
        %348 = vmatprep.subr.mxu0 0.0
        %349 = vmatpush2.msra.mxu0 0.0
        %350 = vmatprep.subr.mxu0 0.0
        %351 = vmatpush2.msra.mxu0 0.0
        %352 = vmatprep.subr.mxu0 0.0
        %353 = vmatpush2.msra.mxu0 0.0
        %354 = vmatprep.subr.mxu0 0.0
        %355 = vmatpush2.msra.mxu0 0.0
        %356 = vmatprep.subr.mxu0 0.0
        %357 = vmatpush2.msra.mxu0 0.0
        %358 = vmatprep.subr.mxu0 0.0
        %359 = vmatpush2.msra.mxu0 0.0
        %360 = vmatprep.subr.mxu0 0.0
        %361 = vmatpush2.msra.mxu0 0.0
        %362 = vmatprep.subr.mxu0 0.0
        %363 = vmatpush2.msra.mxu0 0.0
        %364 = vmatprep.mubr.f32.mxu0 0.0
        %365 = vmatmul.mubr.f32.gmra.mxu0 %v271
        %v366 = vpop.f32.mrf.mxu0
        %v367 = vadd.f32 0.0, %v366
        %v368 = vpop.f32.mrf.mxu0
        %369 = vmatprep.mubr.f32.mxu0 0.0
        %370 = vmatmul.mubr.f32.gmra.mxu0 %v274
        %v371 = vpop.f32.mrf.mxu0
        %v372 = vadd.f32 0.0, %v371
        %v373 = vpop.f32.mrf.mxu0
        %374 = vmatprep.mubr.f32.mxu0 0.0
        %375 = vmatmul.mubr.f32.gmra.mxu0 %v277
        %v376 = vpop.f32.mrf.mxu0
        %v377 = vadd.f32 0.0, %v376
        %v378 = vpop.f32.mrf.mxu0
        %379 = vmatprep.mubr.f32.mxu0 0.0
        %380 = vmatmul.mubr.f32.gmra.mxu0 %v280
        %v381 = vpop.f32.mrf.mxu0
        %v382 = vadd.f32 0.0, %v381
        %v383 = vpop.f32.mrf.mxu0
        %384 = vmatprep.mubr.f32.mxu0 0.0
        %385 = vmatmul.mubr.f32.gmra.mxu0 %v283
        %v386 = vpop.f32.mrf.mxu0
        %v387 = vadd.f32 0.0, %v386
        %v388 = vpop.f32.mrf.mxu0
        %389 = vmatprep.mubr.f32.mxu0 0.0
        %390 = vmatmul.mubr.f32.gmra.mxu0 %v286
        %v391 = vpop.f32.mrf.mxu0
        %v392 = vadd.f32 0.0, %v391
        %v393 = vpop.f32.mrf.mxu0
        %394 = vmatprep.mubr.f32.mxu0 0.0
        %395 = vmatmul.mubr.f32.gmra.mxu0 %v289
        %v396 = vpop.f32.mrf.mxu0
        %v397 = vadd.f32 0.0, %v396
        %v398 = vpop.f32.mrf.mxu0
        %399 = vmatprep.mubr.f32.mxu0 0.0
        %400 = vmatmul.mubr.f32.gmra.mxu0 %v292
        %v401 = vpop.f32.mrf.mxu0
        %v402 = vadd.f32 0.0, %v401
        %v403 = vpop.f32.mrf.mxu0
        %404 = vmatprep.mubr.f32.mxu0 0.0
        %405 = vmatmul.mubr.f32.gmra.mxu0 %v295
        %v406 = vpop.f32.mrf.mxu0
        %v407 = vadd.f32 0.0, %v406
        %v408 = vpop.f32.mrf.mxu0
        %409 = vmatprep.mubr.f32.mxu0 0.0
        %410 = vmatmul.mubr.f32.gmra.mxu0 %v298
        %v411 = vpop.f32.mrf.mxu0
        %v412 = vadd.f32 0.0, %v411
        %v413 = vpop.f32.mrf.mxu0
        %414 = vdwg.mxu0
        %v416 = vsel %vm269, %v256, 0
        %418 = vmatprep.subr.mxu0 0.0
        %419 = vmatpush1.msra.mxu0 0.0
        %420 = vmatprep.subr.mxu0 0.0
        %421 = vmatpush1.msra.mxu0 0.0
        %422 = vmatprep.subr.mxu0 0.0
        %423 = vmatpush1.msra.mxu0 0.0
        %424 = vmatprep.subr.mxu0 0.0
        %425 = vmatpush1.msra.mxu0 0.0
        %426 = vmatprep.subr.mxu0 0.0
        %427 = vmatpush1.msra.mxu0 0.0
        %428 = vmatprep.subr.mxu0 0.0
        %429 = vmatpush1.msra.mxu0 0.0
        %430 = vmatprep.subr.mxu0 0.0
        %431 = vmatpush1.msra.mxu0 0.0
        %432 = vmatprep.subr.mxu0 0.0
        %433 = vmatpush1.msra.mxu0 0.0
        %434 = vmatprep.subr.mxu0 0.0
        %435 = vmatpush1.msra.mxu0 0.0
        %436 = vmatprep.subr.mxu0 0.0
        %437 = vmatpush1.msra.mxu0 0.0
        %438 = vmatprep.subr.mxu0 0.0
        %439 = vmatpush1.msra.mxu0 0.0
        %440 = vmatprep.subr.mxu0 0.0
        %441 = vmatpush1.msra.mxu0 0.0
        %442 = vmatprep.subr.mxu0 0.0
        %443 = vmatpush1.msra.mxu0 0.0
        %444 = vmatprep.subr.mxu0 0.0
        %445 = vmatpush1.msra.mxu0 0.0
        %446 = vmatprep.subr.mxu0 0.0
        %447 = vmatpush1.msra.mxu0 %v372
        %448 = vmatprep.subr.mxu0 0.0
        %449 = vmatpush1.msra.mxu0 %v367
        %450 = vmatprep.subr.mxu0 0.0
        %451 = vmatpush2.msra.mxu0 0.0
        %452 = vmatprep.subr.mxu0 0.0
        %453 = vmatpush2.msra.mxu0 0.0
        %454 = vmatprep.subr.mxu0 0.0
        %455 = vmatpush2.msra.mxu0 0.0
        %456 = vmatprep.subr.mxu0 0.0
        %457 = vmatpush2.msra.mxu0 0.0
        %458 = vmatprep.subr.mxu0 0.0
        %459 = vmatpush2.msra.mxu0 0.0
        %460 = vmatprep.subr.mxu0 0.0
        %461 = vmatpush2.msra.mxu0 0.0
        %462 = vmatprep.subr.mxu0 0.0
        %463 = vmatpush2.msra.mxu0 0.0
        %464 = vmatprep.subr.mxu0 0.0
        %465 = vmatpush2.msra.mxu0 0.0
        %466 = vmatprep.subr.mxu0 0.0
        %467 = vmatpush2.msra.mxu0 0.0
        %468 = vmatprep.subr.mxu0 0.0
        %469 = vmatpush2.msra.mxu0 0.0
        %470 = vmatprep.subr.mxu0 0.0
        %471 = vmatpush2.msra.mxu0 0.0
        %472 = vmatprep.subr.mxu0 0.0
        %473 = vmatpush2.msra.mxu0 0.0
        %474 = vmatprep.subr.mxu0 0.0
        %475 = vmatpush2.msra.mxu0 0.0
        %476 = vmatprep.subr.mxu0 0.0
        %477 = vmatpush2.msra.mxu0 0.0
        %478 = vmatprep.subr.mxu0 0.0
        %479 = vmatpush2.msra.mxu0 0.0
        %480 = vmatprep.subr.mxu0 0.0
        %481 = vmatpush2.msra.mxu0 0.0
        %482 = vmatprep.mubr.f32.mxu0 0.0
        %483 = vmatmul.mubr.f32.gmra.mxu0 %v416
        %v484 = vpop.f32.mrf.mxu0
        %v485 = vadd.f32 0.0, %v484
        %v486 = vpop.f32.mrf.mxu0
        %487 = vdwg.mxu0
        %488 = vmatprep.subr.mxu0 0.0
        %489 = vmatpush1.msra.mxu0 0.0
        %490 = vmatprep.subr.mxu0 0.0
        %491 = vmatpush1.msra.mxu0 0.0
        %492 = vmatprep.subr.mxu0 0.0
        %493 = vmatpush1.msra.mxu0 0.0
        %494 = vmatprep.subr.mxu0 0.0
        %495 = vmatpush1.msra.mxu0 0.0
        %496 = vmatprep.subr.mxu0 0.0
        %497 = vmatpush1.msra.mxu0 0.0
        %498 = vmatprep.subr.mxu0 0.0
        %499 = vmatpush1.msra.mxu0 0.0
        %500 = vmatprep.subr.mxu0 0.0
        %501 = vmatpush1.msra.mxu0 0.0
        %502 = vmatprep.subr.mxu0 0.0
        %503 = vmatpush1.msra.mxu0 0.0
        %504 = vmatprep.subr.mxu0 0.0
        %505 = vmatpush1.msra.mxu0 0.0
        %506 = vmatprep.subr.mxu0 0.0
        %507 = vmatpush1.msra.mxu0 0.0
        %508 = vmatprep.subr.mxu0 0.0
        %509 = vmatpush1.msra.mxu0 0.0
        %510 = vmatprep.subr.mxu0 0.0
        %511 = vmatpush1.msra.mxu0 0.0
        %512 = vmatprep.subr.mxu0 0.0
        %513 = vmatpush1.msra.mxu0 0.0
        %514 = vmatprep.subr.mxu0 0.0
        %515 = vmatpush1.msra.mxu0 0.0
        %516 = vmatprep.subr.mxu0 0.0
        %517 = vmatpush1.msra.mxu0 %v382
        %518 = vmatprep.subr.mxu0 0.0
        %519 = vmatpush1.msra.mxu0 %v377
        %520 = vmatprep.subr.mxu0 0.0
        %521 = vmatpush2.msra.mxu0 0.0
        %522 = vmatprep.subr.mxu0 0.0
        %523 = vmatpush2.msra.mxu0 0.0
        %524 = vmatprep.subr.mxu0 0.0
        %525 = vmatpush2.msra.mxu0 0.0
        %526 = vmatprep.subr.mxu0 0.0
        %527 = vmatpush2.msra.mxu0 0.0
        %528 = vmatprep.subr.mxu0 0.0
        %529 = vmatpush2.msra.mxu0 0.0
        %530 = vmatprep.subr.mxu0 0.0
        %531 = vmatpush2.msra.mxu0 0.0
        %532 = vmatprep.subr.mxu0 0.0
        %533 = vmatpush2.msra.mxu0 0.0
        %534 = vmatprep.subr.mxu0 0.0
        %535 = vmatpush2.msra.mxu0 0.0
        %536 = vmatprep.subr.mxu0 0.0
        %537 = vmatpush2.msra.mxu0 0.0
        %538 = vmatprep.subr.mxu0 0.0
        %539 = vmatpush2.msra.mxu0 0.0
        %540 = vmatprep.subr.mxu0 0.0
        %541 = vmatpush2.msra.mxu0 0.0
        %542 = vmatprep.subr.mxu0 0.0
        %543 = vmatpush2.msra.mxu0 0.0
        %544 = vmatprep.subr.mxu0 0.0
        %545 = vmatpush2.msra.mxu0 0.0
        %546 = vmatprep.subr.mxu0 0.0
        %547 = vmatpush2.msra.mxu0 0.0
        %548 = vmatprep.subr.mxu0 0.0
        %549 = vmatpush2.msra.mxu0 0.0
        %550 = vmatprep.subr.mxu0 0.0
        %551 = vmatpush2.msra.mxu0 0.0
        %552 = vmatprep.mubr.f32.mxu0 0.0
        %553 = vmatmul.mubr.f32.gmra.mxu0 %v416
        %v554 = vpop.f32.mrf.mxu0
        %v555 = vadd.f32 0.0, %v554
        %v556 = vpop.f32.mrf.mxu0
        %557 = vdwg.mxu0
        %558 = vmatprep.subr.mxu0 0.0
        %559 = vmatpush1.msra.mxu0 0.0
        %560 = vmatprep.subr.mxu0 0.0
        %561 = vmatpush1.msra.mxu0 0.0
        %562 = vmatprep.subr.mxu0 0.0
        %563 = vmatpush1.msra.mxu0 0.0
        %564 = vmatprep.subr.mxu0 0.0
        %565 = vmatpush1.msra.mxu0 0.0
        %566 = vmatprep.subr.mxu0 0.0
        %567 = vmatpush1.msra.mxu0 0.0
        %568 = vmatprep.subr.mxu0 0.0
        %569 = vmatpush1.msra.mxu0 0.0
        %570 = vmatprep.subr.mxu0 0.0
        %571 = vmatpush1.msra.mxu0 0.0
        %572 = vmatprep.subr.mxu0 0.0
        %573 = vmatpush1.msra.mxu0 0.0
        %574 = vmatprep.subr.mxu0 0.0
        %575 = vmatpush1.msra.mxu0 0.0
        %576 = vmatprep.subr.mxu0 0.0
        %577 = vmatpush1.msra.mxu0 0.0
        %578 = vmatprep.subr.mxu0 0.0
        %579 = vmatpush1.msra.mxu0 0.0
        %580 = vmatprep.subr.mxu0 0.0
        %581 = vmatpush1.msra.mxu0 0.0
        %582 = vmatprep.subr.mxu0 0.0
        %583 = vmatpush1.msra.mxu0 0.0
        %584 = vmatprep.subr.mxu0 0.0
        %585 = vmatpush1.msra.mxu0 0.0
        %586 = vmatprep.subr.mxu0 0.0
        %587 = vmatpush1.msra.mxu0 %v392
        %588 = vmatprep.subr.mxu0 0.0
        %589 = vmatpush1.msra.mxu0 %v387
        %590 = vmatprep.subr.mxu0 0.0
        %591 = vmatpush2.msra.mxu0 0.0
        %592 = vmatprep.subr.mxu0 0.0
        %593 = vmatpush2.msra.mxu0 0.0
        %594 = vmatprep.subr.mxu0 0.0
        %595 = vmatpush2.msra.mxu0 0.0
        %596 = vmatprep.subr.mxu0 0.0
        %597 = vmatpush2.msra.mxu0 0.0
        %598 = vmatprep.subr.mxu0 0.0
        %599 = vmatpush2.msra.mxu0 0.0
        %600 = vmatprep.subr.mxu0 0.0
        %601 = vmatpush2.msra.mxu0 0.0
        %602 = vmatprep.subr.mxu0 0.0
        %603 = vmatpush2.msra.mxu0 0.0
        %604 = vmatprep.subr.mxu0 0.0
        %605 = vmatpush2.msra.mxu0 0.0
        %606 = vmatprep.subr.mxu0 0.0
        %607 = vmatpush2.msra.mxu0 0.0
        %608 = vmatprep.subr.mxu0 0.0
        %609 = vmatpush2.msra.mxu0 0.0
        %610 = vmatprep.subr.mxu0 0.0
        %611 = vmatpush2.msra.mxu0 0.0
        %612 = vmatprep.subr.mxu0 0.0
        %613 = vmatpush2.msra.mxu0 0.0
        %614 = vmatprep.subr.mxu0 0.0
        %615 = vmatpush2.msra.mxu0 0.0
        %616 = vmatprep.subr.mxu0 0.0
        %617 = vmatpush2.msra.mxu0 0.0
        %618 = vmatprep.subr.mxu0 0.0
        %619 = vmatpush2.msra.mxu0 0.0
        %620 = vmatprep.subr.mxu0 0.0
        %621 = vmatpush2.msra.mxu0 0.0
        %622 = vmatprep.mubr.f32.mxu0 0.0
        %623 = vmatmul.mubr.f32.gmra.mxu0 %v416
        %v624 = vpop.f32.mrf.mxu0
        %v625 = vadd.f32 0.0, %v624
        %v626 = vpop.f32.mrf.mxu0
        %627 = vdwg.mxu0
        %628 = vmatprep.subr.mxu0 0.0
        %629 = vmatpush1.msra.mxu0 0.0
        %630 = vmatprep.subr.mxu0 0.0
        %631 = vmatpush1.msra.mxu0 0.0
        %632 = vmatprep.subr.mxu0 0.0
        %633 = vmatpush1.msra.mxu0 0.0
        %634 = vmatprep.subr.mxu0 0.0
        %635 = vmatpush1.msra.mxu0 0.0
        %636 = vmatprep.subr.mxu0 0.0
        %637 = vmatpush1.msra.mxu0 0.0
        %638 = vmatprep.subr.mxu0 0.0
        %639 = vmatpush1.msra.mxu0 0.0
        %640 = vmatprep.subr.mxu0 0.0
        %641 = vmatpush1.msra.mxu0 0.0
        %642 = vmatprep.subr.mxu0 0.0
        %643 = vmatpush1.msra.mxu0 0.0
        %644 = vmatprep.subr.mxu0 0.0
        %645 = vmatpush1.msra.mxu0 0.0
        %646 = vmatprep.subr.mxu0 0.0
        %647 = vmatpush1.msra.mxu0 0.0
        %648 = vmatprep.subr.mxu0 0.0
        %649 = vmatpush1.msra.mxu0 0.0
        %650 = vmatprep.subr.mxu0 0.0
        %651 = vmatpush1.msra.mxu0 0.0
        %652 = vmatprep.subr.mxu0 0.0
        %653 = vmatpush1.msra.mxu0 0.0
        %654 = vmatprep.subr.mxu0 0.0
        %655 = vmatpush1.msra.mxu0 0.0
        %656 = vmatprep.subr.mxu0 0.0
        %657 = vmatpush1.msra.mxu0 %v402
        %658 = vmatprep.subr.mxu0 0.0
        %659 = vmatpush1.msra.mxu0 %v397
        %660 = vmatprep.subr.mxu0 0.0
        %661 = vmatpush2.msra.mxu0 0.0
        %662 = vmatprep.subr.mxu0 0.0
        %663 = vmatpush2.msra.mxu0 0.0
        %664 = vmatprep.subr.mxu0 0.0
        %665 = vmatpush2.msra.mxu0 0.0
        %666 = vmatprep.subr.mxu0 0.0
        %667 = vmatpush2.msra.mxu0 0.0
        %668 = vmatprep.subr.mxu0 0.0
        %669 = vmatpush2.msra.mxu0 0.0
        %670 = vmatprep.subr.mxu0 0.0
        %671 = vmatpush2.msra.mxu0 0.0
        %672 = vmatprep.subr.mxu0 0.0
        %673 = vmatpush2.msra.mxu0 0.0
        %674 = vmatprep.subr.mxu0 0.0
        %675 = vmatpush2.msra.mxu0 0.0
        %676 = vmatprep.subr.mxu0 0.0
        %677 = vmatpush2.msra.mxu0 0.0
        %678 = vmatprep.subr.mxu0 0.0
        %679 = vmatpush2.msra.mxu0 0.0
        %680 = vmatprep.subr.mxu0 0.0
        %681 = vmatpush2.msra.mxu0 0.0
        %682 = vmatprep.subr.mxu0 0.0
        %683 = vmatpush2.msra.mxu0 0.0
        %684 = vmatprep.subr.mxu0 0.0
        %685 = vmatpush2.msra.mxu0 0.0
        %686 = vmatprep.subr.mxu0 0.0
        %687 = vmatpush2.msra.mxu0 0.0
        %688 = vmatprep.subr.mxu0 0.0
        %689 = vmatpush2.msra.mxu0 0.0
        %690 = vmatprep.subr.mxu0 0.0
        %691 = vmatpush2.msra.mxu0 0.0
        %692 = vmatprep.mubr.f32.mxu0 0.0
        %693 = vmatmul.mubr.f32.gmra.mxu0 %v416
        %v694 = vpop.f32.mrf.mxu0
        %v695 = vadd.f32 0.0, %v694
        %v696 = vpop.f32.mrf.mxu0
        %697 = vdwg.mxu0
        %698 = vmatprep.subr.mxu0 0.0
        %699 = vmatpush1.msra.mxu0 0.0
        %700 = vmatprep.subr.mxu0 0.0
        %701 = vmatpush1.msra.mxu0 0.0
        %702 = vmatprep.subr.mxu0 0.0
        %703 = vmatpush1.msra.mxu0 0.0
        %704 = vmatprep.subr.mxu0 0.0
        %705 = vmatpush1.msra.mxu0 0.0
        %706 = vmatprep.subr.mxu0 0.0
        %707 = vmatpush1.msra.mxu0 0.0
        %708 = vmatprep.subr.mxu0 0.0
        %709 = vmatpush1.msra.mxu0 0.0
        %710 = vmatprep.subr.mxu0 0.0
        %711 = vmatpush1.msra.mxu0 0.0
        %712 = vmatprep.subr.mxu0 0.0
        %713 = vmatpush1.msra.mxu0 0.0
        %714 = vmatprep.subr.mxu0 0.0
        %715 = vmatpush1.msra.mxu0 0.0
        %716 = vmatprep.subr.mxu0 0.0
        %717 = vmatpush1.msra.mxu0 0.0
        %718 = vmatprep.subr.mxu0 0.0
        %719 = vmatpush1.msra.mxu0 0.0
        %720 = vmatprep.subr.mxu0 0.0
        %721 = vmatpush1.msra.mxu0 0.0
        %722 = vmatprep.subr.mxu0 0.0
        %723 = vmatpush1.msra.mxu0 0.0
        %724 = vmatprep.subr.mxu0 0.0
        %725 = vmatpush1.msra.mxu0 0.0
        %726 = vmatprep.subr.mxu0 0.0
        %727 = vmatpush1.msra.mxu0 %v412
        %728 = vmatprep.subr.mxu0 0.0
        %729 = vmatpush1.msra.mxu0 %v407
        %730 = vmatprep.subr.mxu0 0.0
        %731 = vmatpush2.msra.mxu0 0.0
        %732 = vmatprep.subr.mxu0 0.0
        %733 = vmatpush2.msra.mxu0 0.0
        %734 = vmatprep.subr.mxu0 0.0
        %735 = vmatpush2.msra.mxu0 0.0
        %736 = vmatprep.subr.mxu0 0.0
        %737 = vmatpush2.msra.mxu0 0.0
        %738 = vmatprep.subr.mxu0 0.0
        %739 = vmatpush2.msra.mxu0 0.0
        %740 = vmatprep.subr.mxu0 0.0
        %741 = vmatpush2.msra.mxu0 0.0
        %742 = vmatprep.subr.mxu0 0.0
        %743 = vmatpush2.msra.mxu0 0.0
        %744 = vmatprep.subr.mxu0 0.0
        %745 = vmatpush2.msra.mxu0 0.0
        %746 = vmatprep.subr.mxu0 0.0
        %747 = vmatpush2.msra.mxu0 0.0
        %748 = vmatprep.subr.mxu0 0.0
        %749 = vmatpush2.msra.mxu0 0.0
        %750 = vmatprep.subr.mxu0 0.0
        %751 = vmatpush2.msra.mxu0 0.0
        %752 = vmatprep.subr.mxu0 0.0
        %753 = vmatpush2.msra.mxu0 0.0
        %754 = vmatprep.subr.mxu0 0.0
        %755 = vmatpush2.msra.mxu0 0.0
        %756 = vmatprep.subr.mxu0 0.0
        %757 = vmatpush2.msra.mxu0 0.0
        %758 = vmatprep.subr.mxu0 0.0
        %759 = vmatpush2.msra.mxu0 0.0
        %760 = vmatprep.subr.mxu0 0.0
        %761 = vmatpush2.msra.mxu0 0.0
        %762 = vmatprep.mubr.f32.mxu0 0.0
        %763 = vmatmul.mubr.f32.gmra.mxu0 %v416
        %v764 = vpop.f32.mrf.mxu0
        %v765 = vadd.f32 0.0, %v764
        %v766 = vpop.f32.mrf.mxu0
        %767 = vdwg.mxu0
        %v768 = vmul.f32 %v485, %v485
        %v769 = vmul.f32 %v555, %v555
        %v770 = vmul.f32 %v485, %v555
        %v771 = vsub.f32 %v625, %v768
        %v772 = vsub.f32 %v695, %v769
        %v773 = vsub.f32 %v765, %v770
        %v774 = vmul.f32 %v773, 2.0
        %v775 = vadd.f32 %v774, 58.5225
        %v776 = vadd.f32 %v771, %v772
        %v777 = vadd.f32 %v776, 58.5225
        %v778 = vrcp.pop %v777
        %v779 = vmul.f32 %v775, %v778
        %v780 = vmul.f32 %v770, 2.0
        %v781 = vadd.f32 %v780, 6.5025
        %v782 = vadd.f32 %v768, %v769
        %v783 = vadd.f32 %v782, 6.5025
        %v784 = vrcp.pop %v783
        %v785 = vmul.f32 %v781, %v784
        %v786 = vmul.f32 %v785, %v779
        %vm787 = vcmask 46080
        %v788 = vsel %vm787, %v786, 0.0
        %789 = vadd.xlane.f32.xlu0 %v788
        %v790 = vpop.xlane.xlu0 %789
        %vm791 = vcmask 1045504
        %v792 = vsel %vm791, %v790, 0.0
        %v793 = vrot.slane %v792, 4
        %v794 = vadd.f32 %v792, %v793
        %v795 = vrot.slane %v794, 2
        %v796 = vadd.f32 %v794, %v795
        %v797 = vrot.slane %v796, 1
        %v798 = vadd.f32 %v796, %v797
        %v799 = vmul.f32 %v798, 0.027777778
        %vm800 = vcmask 0
        %801 = vst.msk [vmem:[%s255] sm:$0x1] %vm800, %v799
        %s802 = scalar_lea.vmem %s214, 16 [#allocation2]
        %v803 = vld [vmem:[%s802] sm:$0xff]
        %v804 = vld [vmem:[%s802 + $0x8] sm:$0xff]
        %s805 = scalar_lea.vmem %s223, 16 [#allocation4]
        %v806 = vld [vmem:[%s805] sm:$0xff]
        %v807 = vld [vmem:[%s805 + $0x8] sm:$0xff]
        %v808 = vmul.f32 %v803, %v803
        %v809 = vmul.f32 %v804, %v804
        %v810 = vmul.f32 %v806, %v806
        %v811 = vmul.f32 %v807, %v807
        %v812 = vmul.f32 %v803, %v806
        %v813 = vmul.f32 %v804, %v807
        %v815 = vsel %vm269, %v803, 0
        %v818 = vsel %vm269, %v804, 0
        %v821 = vsel %vm269, %v806, 0
        %v824 = vsel %vm269, %v807, 0
        %v827 = vsel %vm269, %v808, 0
        %v830 = vsel %vm269, %v809, 0
        %v833 = vsel %vm269, %v810, 0
        %v836 = vsel %vm269, %v811, 0
        %v839 = vsel %vm269, %v812, 0
        %v842 = vsel %vm269, %v813, 0
        %844 = vmatprep.subr.mxu0 0.0
        %845 = vmatpush1.msra.mxu0 0.0
        %846 = vmatprep.subr.mxu0 0.0
        %847 = vmatpush1.msra.mxu0 0.0
        %848 = vmatprep.subr.mxu0 0.0
        %849 = vmatpush1.msra.mxu0 0.0
        %850 = vmatprep.subr.mxu0 0.0
        %851 = vmatpush1.msra.mxu0 0.0
        %852 = vmatprep.subr.mxu0 0.0
        %853 = vmatpush1.msra.mxu0 0.0
        %854 = vmatprep.subr.mxu0 0.0
        %855 = vmatpush1.msra.mxu0 0.0
        %856 = vmatprep.subr.mxu0 0.0
        %857 = vmatpush1.msra.mxu0 0.0
        %858 = vmatprep.subr.mxu0 0.0
        %859 = vmatpush1.msra.mxu0 0.0
        %860 = vmatprep.subr.mxu0 0.0
        %861 = vmatpush1.msra.mxu0 0.0
        %862 = vmatprep.subr.mxu0 0.0
        %863 = vmatpush1.msra.mxu0 0.0
        %864 = vmatprep.subr.mxu0 0.0
        %865 = vmatpush1.msra.mxu0 0.0
        %866 = vmatprep.subr.mxu0 0.0
        %867 = vmatpush1.msra.mxu0 0.0
        %868 = vmatprep.subr.mxu0 0.0
        %869 = vmatpush1.msra.mxu0 0.0
        %870 = vmatprep.subr.mxu0 0.0
        %871 = vmatpush1.msra.mxu0 0.0
        %872 = vmatprep.subr.mxu0 0.0
        %873 = vmatpush1.msra.mxu0 %v258
        %874 = vmatprep.subr.mxu0 0.0
        %875 = vmatpush1.msra.mxu0 %v257
        %876 = vmatprep.subr.mxu0 0.0
        %877 = vmatpush2.msra.mxu0 0.0
        %878 = vmatprep.subr.mxu0 0.0
        %879 = vmatpush2.msra.mxu0 0.0
        %880 = vmatprep.subr.mxu0 0.0
        %881 = vmatpush2.msra.mxu0 0.0
        %882 = vmatprep.subr.mxu0 0.0
        %883 = vmatpush2.msra.mxu0 0.0
        %884 = vmatprep.subr.mxu0 0.0
        %885 = vmatpush2.msra.mxu0 0.0
        %886 = vmatprep.subr.mxu0 0.0
        %887 = vmatpush2.msra.mxu0 0.0
        %888 = vmatprep.subr.mxu0 0.0
        %889 = vmatpush2.msra.mxu0 0.0
        %890 = vmatprep.subr.mxu0 0.0
        %891 = vmatpush2.msra.mxu0 0.0
        %892 = vmatprep.subr.mxu0 0.0
        %893 = vmatpush2.msra.mxu0 0.0
        %894 = vmatprep.subr.mxu0 0.0
        %895 = vmatpush2.msra.mxu0 0.0
        %896 = vmatprep.subr.mxu0 0.0
        %897 = vmatpush2.msra.mxu0 0.0
        %898 = vmatprep.subr.mxu0 0.0
        %899 = vmatpush2.msra.mxu0 0.0
        %900 = vmatprep.subr.mxu0 0.0
        %901 = vmatpush2.msra.mxu0 0.0
        %902 = vmatprep.subr.mxu0 0.0
        %903 = vmatpush2.msra.mxu0 0.0
        %904 = vmatprep.subr.mxu0 0.0
        %905 = vmatpush2.msra.mxu0 0.0
        %906 = vmatprep.subr.mxu0 0.0
        %907 = vmatpush2.msra.mxu0 0.0
        %908 = vmatprep.mubr.f32.mxu0 0.0
        %909 = vmatmul.mubr.f32.gmra.mxu0 %v815
        %v910 = vpop.f32.mrf.mxu0
        %v911 = vadd.f32 0.0, %v910
        %v912 = vpop.f32.mrf.mxu0
        %913 = vmatprep.mubr.f32.mxu0 0.0
        %914 = vmatmul.mubr.f32.gmra.mxu0 %v818
        %v915 = vpop.f32.mrf.mxu0
        %v916 = vadd.f32 0.0, %v915
        %v917 = vpop.f32.mrf.mxu0
        %918 = vmatprep.mubr.f32.mxu0 0.0
        %919 = vmatmul.mubr.f32.gmra.mxu0 %v821
        %v920 = vpop.f32.mrf.mxu0
        %v921 = vadd.f32 0.0, %v920
        %v922 = vpop.f32.mrf.mxu0
        %923 = vmatprep.mubr.f32.mxu0 0.0
        %924 = vmatmul.mubr.f32.gmra.mxu0 %v824
        %v925 = vpop.f32.mrf.mxu0
        %v926 = vadd.f32 0.0, %v925
        %v927 = vpop.f32.mrf.mxu0
        %928 = vmatprep.mubr.f32.mxu0 0.0
        %929 = vmatmul.mubr.f32.gmra.mxu0 %v827
        %v930 = vpop.f32.mrf.mxu0
        %v931 = vadd.f32 0.0, %v930
        %v932 = vpop.f32.mrf.mxu0
        %933 = vmatprep.mubr.f32.mxu0 0.0
        %934 = vmatmul.mubr.f32.gmra.mxu0 %v830
        %v935 = vpop.f32.mrf.mxu0
        %v936 = vadd.f32 0.0, %v935
        %v937 = vpop.f32.mrf.mxu0
        %938 = vmatprep.mubr.f32.mxu0 0.0
        %939 = vmatmul.mubr.f32.gmra.mxu0 %v833
        %v940 = vpop.f32.mrf.mxu0
        %v941 = vadd.f32 0.0, %v940
        %v942 = vpop.f32.mrf.mxu0
        %943 = vmatprep.mubr.f32.mxu0 0.0
        %944 = vmatmul.mubr.f32.gmra.mxu0 %v836
        %v945 = vpop.f32.mrf.mxu0
        %v946 = vadd.f32 0.0, %v945
        %v947 = vpop.f32.mrf.mxu0
        %948 = vmatprep.mubr.f32.mxu0 0.0
        %949 = vmatmul.mubr.f32.gmra.mxu0 %v839
        %v950 = vpop.f32.mrf.mxu0
        %v951 = vadd.f32 0.0, %v950
        %v952 = vpop.f32.mrf.mxu0
        %953 = vmatprep.mubr.f32.mxu0 0.0
        %954 = vmatmul.mubr.f32.gmra.mxu0 %v842
        %v955 = vpop.f32.mrf.mxu0
        %v956 = vadd.f32 0.0, %v955
        %v957 = vpop.f32.mrf.mxu0
        %958 = vdwg.mxu0
        %959 = vmatprep.subr.mxu0 0.0
        %960 = vmatpush1.msra.mxu0 0.0
        %961 = vmatprep.subr.mxu0 0.0
        %962 = vmatpush1.msra.mxu0 0.0
        %963 = vmatprep.subr.mxu0 0.0
        %964 = vmatpush1.msra.mxu0 0.0
        %965 = vmatprep.subr.mxu0 0.0
        %966 = vmatpush1.msra.mxu0 0.0
        %967 = vmatprep.subr.mxu0 0.0
        %968 = vmatpush1.msra.mxu0 0.0
        %969 = vmatprep.subr.mxu0 0.0
        %970 = vmatpush1.msra.mxu0 0.0
        %971 = vmatprep.subr.mxu0 0.0
        %972 = vmatpush1.msra.mxu0 0.0
        %973 = vmatprep.subr.mxu0 0.0
        %974 = vmatpush1.msra.mxu0 0.0
        %975 = vmatprep.subr.mxu0 0.0
        %976 = vmatpush1.msra.mxu0 0.0
        %977 = vmatprep.subr.mxu0 0.0
        %978 = vmatpush1.msra.mxu0 0.0
        %979 = vmatprep.subr.mxu0 0.0
        %980 = vmatpush1.msra.mxu0 0.0
        %981 = vmatprep.subr.mxu0 0.0
        %982 = vmatpush1.msra.mxu0 0.0
        %983 = vmatprep.subr.mxu0 0.0
        %984 = vmatpush1.msra.mxu0 0.0
        %985 = vmatprep.subr.mxu0 0.0
        %986 = vmatpush1.msra.mxu0 0.0
        %987 = vmatprep.subr.mxu0 0.0
        %988 = vmatpush1.msra.mxu0 %v916
        %989 = vmatprep.subr.mxu0 0.0
        %990 = vmatpush1.msra.mxu0 %v911
        %991 = vmatprep.subr.mxu0 0.0
        %992 = vmatpush2.msra.mxu0 0.0
        %993 = vmatprep.subr.mxu0 0.0
        %994 = vmatpush2.msra.mxu0 0.0
        %995 = vmatprep.subr.mxu0 0.0
        %996 = vmatpush2.msra.mxu0 0.0
        %997 = vmatprep.subr.mxu0 0.0
        %998 = vmatpush2.msra.mxu0 0.0
        %999 = vmatprep.subr.mxu0 0.0
        %1000 = vmatpush2.msra.mxu0 0.0
        %1001 = vmatprep.subr.mxu0 0.0
        %1002 = vmatpush2.msra.mxu0 0.0
        %1003 = vmatprep.subr.mxu0 0.0
        %1004 = vmatpush2.msra.mxu0 0.0
        %1005 = vmatprep.subr.mxu0 0.0
        %1006 = vmatpush2.msra.mxu0 0.0
        %1007 = vmatprep.subr.mxu0 0.0
        %1008 = vmatpush2.msra.mxu0 0.0
        %1009 = vmatprep.subr.mxu0 0.0
        %1010 = vmatpush2.msra.mxu0 0.0
        %1011 = vmatprep.subr.mxu0 0.0
        %1012 = vmatpush2.msra.mxu0 0.0
        %1013 = vmatprep.subr.mxu0 0.0
        %1014 = vmatpush2.msra.mxu0 0.0
        %1015 = vmatprep.subr.mxu0 0.0
        %1016 = vmatpush2.msra.mxu0 0.0
        %1017 = vmatprep.subr.mxu0 0.0
        %1018 = vmatpush2.msra.mxu0 0.0
        %1019 = vmatprep.subr.mxu0 0.0
        %1020 = vmatpush2.msra.mxu0 0.0
        %1021 = vmatprep.subr.mxu0 0.0
        %1022 = vmatpush2.msra.mxu0 0.0
        %1023 = vmatprep.mubr.f32.mxu0 0.0
        %1024 = vmatmul.mubr.f32.gmra.mxu0 %v416
        %v1025 = vpop.f32.mrf.mxu0
        %v1026 = vadd.f32 0.0, %v1025
        %v1027 = vpop.f32.mrf.mxu0
        %1028 = vdwg.mxu0
        %1029 = vmatprep.subr.mxu0 0.0
        %1030 = vmatpush1.msra.mxu0 0.0
        %1031 = vmatprep.subr.mxu0 0.0
        %1032 = vmatpush1.msra.mxu0 0.0
        %1033 = vmatprep.subr.mxu0 0.0
        %1034 = vmatpush1.msra.mxu0 0.0
        %1035 = vmatprep.subr.mxu0 0.0
        %1036 = vmatpush1.msra.mxu0 0.0
        %1037 = vmatprep.subr.mxu0 0.0
        %1038 = vmatpush1.msra.mxu0 0.0
        %1039 = vmatprep.subr.mxu0 0.0
        %1040 = vmatpush1.msra.mxu0 0.0
        %1041 = vmatprep.subr.mxu0 0.0
        %1042 = vmatpush1.msra.mxu0 0.0
        %1043 = vmatprep.subr.mxu0 0.0
        %1044 = vmatpush1.msra.mxu0 0.0
        %1045 = vmatprep.subr.mxu0 0.0
        %1046 = vmatpush1.msra.mxu0 0.0
        %1047 = vmatprep.subr.mxu0 0.0
        %1048 = vmatpush1.msra.mxu0 0.0
        %1049 = vmatprep.subr.mxu0 0.0
        %1050 = vmatpush1.msra.mxu0 0.0
        %1051 = vmatprep.subr.mxu0 0.0
        %1052 = vmatpush1.msra.mxu0 0.0
        %1053 = vmatprep.subr.mxu0 0.0
        %1054 = vmatpush1.msra.mxu0 0.0
        %1055 = vmatprep.subr.mxu0 0.0
        %1056 = vmatpush1.msra.mxu0 0.0
        %1057 = vmatprep.subr.mxu0 0.0
        %1058 = vmatpush1.msra.mxu0 %v926
        %1059 = vmatprep.subr.mxu0 0.0
        %1060 = vmatpush1.msra.mxu0 %v921
        %1061 = vmatprep.subr.mxu0 0.0
        %1062 = vmatpush2.msra.mxu0 0.0
        %1063 = vmatprep.subr.mxu0 0.0
        %1064 = vmatpush2.msra.mxu0 0.0
        %1065 = vmatprep.subr.mxu0 0.0
        %1066 = vmatpush2.msra.mxu0 0.0
        %1067 = vmatprep.subr.mxu0 0.0
        %1068 = vmatpush2.msra.mxu0 0.0
        %1069 = vmatprep.subr.mxu0 0.0
        %1070 = vmatpush2.msra.mxu0 0.0
        %1071 = vmatprep.subr.mxu0 0.0
        %1072 = vmatpush2.msra.mxu0 0.0
        %1073 = vmatprep.subr.mxu0 0.0
        %1074 = vmatpush2.msra.mxu0 0.0
        %1075 = vmatprep.subr.mxu0 0.0
        %1076 = vmatpush2.msra.mxu0 0.0
        %1077 = vmatprep.subr.mxu0 0.0
        %1078 = vmatpush2.msra.mxu0 0.0
        %1079 = vmatprep.subr.mxu0 0.0
        %1080 = vmatpush2.msra.mxu0 0.0
        %1081 = vmatprep.subr.mxu0 0.0
        %1082 = vmatpush2.msra.mxu0 0.0
        %1083 = vmatprep.subr.mxu0 0.0
        %1084 = vmatpush2.msra.mxu0 0.0
        %1085 = vmatprep.subr.mxu0 0.0
        %1086 = vmatpush2.msra.mxu0 0.0
        %1087 = vmatprep.subr.mxu0 0.0
        %1088 = vmatpush2.msra.mxu0 0.0
        %1089 = vmatprep.subr.mxu0 0.0
        %1090 = vmatpush2.msra.mxu0 0.0
        %1091 = vmatprep.subr.mxu0 0.0
        %1092 = vmatpush2.msra.mxu0 0.0
        %1093 = vmatprep.mubr.f32.mxu0 0.0
        %1094 = vmatmul.mubr.f32.gmra.mxu0 %v416
        %v1095 = vpop.f32.mrf.mxu0
        %v1096 = vadd.f32 0.0, %v1095
        %v1097 = vpop.f32.mrf.mxu0
        %1098 = vdwg.mxu0
        %1099 = vmatprep.subr.mxu0 0.0
        %1100 = vmatpush1.msra.mxu0 0.0
        %1101 = vmatprep.subr.mxu0 0.0
        %1102 = vmatpush1.msra.mxu0 0.0
        %1103 = vmatprep.subr.mxu0 0.0
        %1104 = vmatpush1.msra.mxu0 0.0
        %1105 = vmatprep.subr.mxu0 0.0
        %1106 = vmatpush1.msra.mxu0 0.0
        %1107 = vmatprep.subr.mxu0 0.0
        %1108 = vmatpush1.msra.mxu0 0.0
        %1109 = vmatprep.subr.mxu0 0.0
        %1110 = vmatpush1.msra.mxu0 0.0
        %1111 = vmatprep.subr.mxu0 0.0
        %1112 = vmatpush1.msra.mxu0 0.0
        %1113 = vmatprep.subr.mxu0 0.0
        %1114 = vmatpush1.msra.mxu0 0.0
        %1115 = vmatprep.subr.mxu0 0.0
        %1116 = vmatpush1.msra.mxu0 0.0
        %1117 = vmatprep.subr.mxu0 0.0
        %1118 = vmatpush1.msra.mxu0 0.0
        %1119 = vmatprep.subr.mxu0 0.0
        %1120 = vmatpush1.msra.mxu0 0.0
        %1121 = vmatprep.subr.mxu0 0.0
        %1122 = vmatpush1.msra.mxu0 0.0
        %1123 = vmatprep.subr.mxu0 0.0
        %1124 = vmatpush1.msra.mxu0 0.0
        %1125 = vmatprep.subr.mxu0 0.0
        %1126 = vmatpush1.msra.mxu0 0.0
        %1127 = vmatprep.subr.mxu0 0.0
        %1128 = vmatpush1.msra.mxu0 %v936
        %1129 = vmatprep.subr.mxu0 0.0
        %1130 = vmatpush1.msra.mxu0 %v931
        %1131 = vmatprep.subr.mxu0 0.0
        %1132 = vmatpush2.msra.mxu0 0.0
        %1133 = vmatprep.subr.mxu0 0.0
        %1134 = vmatpush2.msra.mxu0 0.0
        %1135 = vmatprep.subr.mxu0 0.0
        %1136 = vmatpush2.msra.mxu0 0.0
        %1137 = vmatprep.subr.mxu0 0.0
        %1138 = vmatpush2.msra.mxu0 0.0
        %1139 = vmatprep.subr.mxu0 0.0
        %1140 = vmatpush2.msra.mxu0 0.0
        %1141 = vmatprep.subr.mxu0 0.0
        %1142 = vmatpush2.msra.mxu0 0.0
        %1143 = vmatprep.subr.mxu0 0.0
        %1144 = vmatpush2.msra.mxu0 0.0
        %1145 = vmatprep.subr.mxu0 0.0
        %1146 = vmatpush2.msra.mxu0 0.0
        %1147 = vmatprep.subr.mxu0 0.0
        %1148 = vmatpush2.msra.mxu0 0.0
        %1149 = vmatprep.subr.mxu0 0.0
        %1150 = vmatpush2.msra.mxu0 0.0
        %1151 = vmatprep.subr.mxu0 0.0
        %1152 = vmatpush2.msra.mxu0 0.0
        %1153 = vmatprep.subr.mxu0 0.0
        %1154 = vmatpush2.msra.mxu0 0.0
        %1155 = vmatprep.subr.mxu0 0.0
        %1156 = vmatpush2.msra.mxu0 0.0
        %1157 = vmatprep.subr.mxu0 0.0
        %1158 = vmatpush2.msra.mxu0 0.0
        %1159 = vmatprep.subr.mxu0 0.0
        %1160 = vmatpush2.msra.mxu0 0.0
        %1161 = vmatprep.subr.mxu0 0.0
        %1162 = vmatpush2.msra.mxu0 0.0
        %1163 = vmatprep.mubr.f32.mxu0 0.0
        %1164 = vmatmul.mubr.f32.gmra.mxu0 %v416
        %v1165 = vpop.f32.mrf.mxu0
        %v1166 = vadd.f32 0.0, %v1165
        %v1167 = vpop.f32.mrf.mxu0
        %1168 = vdwg.mxu0
        %1169 = vmatprep.subr.mxu0 0.0
        %1170 = vmatpush1.msra.mxu0 0.0
        %1171 = vmatprep.subr.mxu0 0.0
        %1172 = vmatpush1.msra.mxu0 0.0
        %1173 = vmatprep.subr.mxu0 0.0
        %1174 = vmatpush1.msra.mxu0 0.0
        %1175 = vmatprep.subr.mxu0 0.0
        %1176 = vmatpush1.msra.mxu0 0.0
        %1177 = vmatprep.subr.mxu0 0.0
        %1178 = vmatpush1.msra.mxu0 0.0
        %1179 = vmatprep.subr.mxu0 0.0
        %1180 = vmatpush1.msra.mxu0 0.0
        %1181 = vmatprep.subr.mxu0 0.0
        %1182 = vmatpush1.msra.mxu0 0.0
        %1183 = vmatprep.subr.mxu0 0.0
        %1184 = vmatpush1.msra.mxu0 0.0
        %1185 = vmatprep.subr.mxu0 0.0
        %1186 = vmatpush1.msra.mxu0 0.0
        %1187 = vmatprep.subr.mxu0 0.0
        %1188 = vmatpush1.msra.mxu0 0.0
        %1189 = vmatprep.subr.mxu0 0.0
        %1190 = vmatpush1.msra.mxu0 0.0
        %1191 = vmatprep.subr.mxu0 0.0
        %1192 = vmatpush1.msra.mxu0 0.0
        %1193 = vmatprep.subr.mxu0 0.0
        %1194 = vmatpush1.msra.mxu0 0.0
        %1195 = vmatprep.subr.mxu0 0.0
        %1196 = vmatpush1.msra.mxu0 0.0
        %1197 = vmatprep.subr.mxu0 0.0
        %1198 = vmatpush1.msra.mxu0 %v946
        %1199 = vmatprep.subr.mxu0 0.0
        %1200 = vmatpush1.msra.mxu0 %v941
        %1201 = vmatprep.subr.mxu0 0.0
        %1202 = vmatpush2.msra.mxu0 0.0
        %1203 = vmatprep.subr.mxu0 0.0
        %1204 = vmatpush2.msra.mxu0 0.0
        %1205 = vmatprep.subr.mxu0 0.0
        %1206 = vmatpush2.msra.mxu0 0.0
        %1207 = vmatprep.subr.mxu0 0.0
        %1208 = vmatpush2.msra.mxu0 0.0
        %1209 = vmatprep.subr.mxu0 0.0
        %1210 = vmatpush2.msra.mxu0 0.0
        %1211 = vmatprep.subr.mxu0 0.0
        %1212 = vmatpush2.msra.mxu0 0.0
        %1213 = vmatprep.subr.mxu0 0.0
        %1214 = vmatpush2.msra.mxu0 0.0
        %1215 = vmatprep.subr.mxu0 0.0
        %1216 = vmatpush2.msra.mxu0 0.0
        %1217 = vmatprep.subr.mxu0 0.0
        %1218 = vmatpush2.msra.mxu0 0.0
        %1219 = vmatprep.subr.mxu0 0.0
        %1220 = vmatpush2.msra.mxu0 0.0
        %1221 = vmatprep.subr.mxu0 0.0
        %1222 = vmatpush2.msra.mxu0 0.0
        %1223 = vmatprep.subr.mxu0 0.0
        %1224 = vmatpush2.msra.mxu0 0.0
        %1225 = vmatprep.subr.mxu0 0.0
        %1226 = vmatpush2.msra.mxu0 0.0
        %1227 = vmatprep.subr.mxu0 0.0
        %1228 = vmatpush2.msra.mxu0 0.0
        %1229 = vmatprep.subr.mxu0 0.0
        %1230 = vmatpush2.msra.mxu0 0.0
        %1231 = vmatprep.subr.mxu0 0.0
        %1232 = vmatpush2.msra.mxu0 0.0
        %1233 = vmatprep.mubr.f32.mxu0 0.0
        %1234 = vmatmul.mubr.f32.gmra.mxu0 %v416
        %v1235 = vpop.f32.mrf.mxu0
        %v1236 = vadd.f32 0.0, %v1235
        %v1237 = vpop.f32.mrf.mxu0
        %1238 = vdwg.mxu0
        %1239 = vmatprep.subr.mxu0 0.0
        %1240 = vmatpush1.msra.mxu0 0.0
        %1241 = vmatprep.subr.mxu0 0.0
        %1242 = vmatpush1.msra.mxu0 0.0
        %1243 = vmatprep.subr.mxu0 0.0
        %1244 = vmatpush1.msra.mxu0 0.0
        %1245 = vmatprep.subr.mxu0 0.0
        %1246 = vmatpush1.msra.mxu0 0.0
        %1247 = vmatprep.subr.mxu0 0.0
        %1248 = vmatpush1.msra.mxu0 0.0
        %1249 = vmatprep.subr.mxu0 0.0
        %1250 = vmatpush1.msra.mxu0 0.0
        %1251 = vmatprep.subr.mxu0 0.0
        %1252 = vmatpush1.msra.mxu0 0.0
        %1253 = vmatprep.subr.mxu0 0.0
        %1254 = vmatpush1.msra.mxu0 0.0
        %1255 = vmatprep.subr.mxu0 0.0
        %1256 = vmatpush1.msra.mxu0 0.0
        %1257 = vmatprep.subr.mxu0 0.0
        %1258 = vmatpush1.msra.mxu0 0.0
        %1259 = vmatprep.subr.mxu0 0.0
        %1260 = vmatpush1.msra.mxu0 0.0
        %1261 = vmatprep.subr.mxu0 0.0
        %1262 = vmatpush1.msra.mxu0 0.0
        %1263 = vmatprep.subr.mxu0 0.0
        %1264 = vmatpush1.msra.mxu0 0.0
        %1265 = vmatprep.subr.mxu0 0.0
        %1266 = vmatpush1.msra.mxu0 0.0
        %1267 = vmatprep.subr.mxu0 0.0
        %1268 = vmatpush1.msra.mxu0 %v956
        %1269 = vmatprep.subr.mxu0 0.0
        %1270 = vmatpush1.msra.mxu0 %v951
        %1271 = vmatprep.subr.mxu0 0.0
        %1272 = vmatpush2.msra.mxu0 0.0
        %1273 = vmatprep.subr.mxu0 0.0
        %1274 = vmatpush2.msra.mxu0 0.0
        %1275 = vmatprep.subr.mxu0 0.0
        %1276 = vmatpush2.msra.mxu0 0.0
        %1277 = vmatprep.subr.mxu0 0.0
        %1278 = vmatpush2.msra.mxu0 0.0
        %1279 = vmatprep.subr.mxu0 0.0
        %1280 = vmatpush2.msra.mxu0 0.0
        %1281 = vmatprep.subr.mxu0 0.0
        %1282 = vmatpush2.msra.mxu0 0.0
        %1283 = vmatprep.subr.mxu0 0.0
        %1284 = vmatpush2.msra.mxu0 0.0
        %1285 = vmatprep.subr.mxu0 0.0
        %1286 = vmatpush2.msra.mxu0 0.0
        %1287 = vmatprep.subr.mxu0 0.0
        %1288 = vmatpush2.msra.mxu0 0.0
        %1289 = vmatprep.subr.mxu0 0.0
        %1290 = vmatpush2.msra.mxu0 0.0
        %1291 = vmatprep.subr.mxu0 0.0
        %1292 = vmatpush2.msra.mxu0 0.0
        %1293 = vmatprep.subr.mxu0 0.0
        %1294 = vmatpush2.msra.mxu0 0.0
        %1295 = vmatprep.subr.mxu0 0.0
        %1296 = vmatpush2.msra.mxu0 0.0
        %1297 = vmatprep.subr.mxu0 0.0
        %1298 = vmatpush2.msra.mxu0 0.0
        %1299 = vmatprep.subr.mxu0 0.0
        %1300 = vmatpush2.msra.mxu0 0.0
        %1301 = vmatprep.subr.mxu0 0.0
        %1302 = vmatpush2.msra.mxu0 0.0
        %1303 = vmatprep.mubr.f32.mxu0 0.0
        %1304 = vmatmul.mubr.f32.gmra.mxu0 %v416
        %v1305 = vpop.f32.mrf.mxu0
        %v1306 = vadd.f32 0.0, %v1305
        %v1307 = vpop.f32.mrf.mxu0
        %1308 = vdwg.mxu0
        %v1309 = vmul.f32 %v1026, %v1026
        %v1310 = vmul.f32 %v1096, %v1096
        %v1311 = vmul.f32 %v1026, %v1096
        %v1312 = vsub.f32 %v1166, %v1309
        %v1313 = vsub.f32 %v1236, %v1310
        %v1314 = vsub.f32 %v1306, %v1311
        %v1315 = vmul.f32 %v1314, 2.0
        %v1316 = vadd.f32 %v1315, 58.5225
        %v1317 = vadd.f32 %v1312, %v1313
        %v1318 = vadd.f32 %v1317, 58.5225
        %v1319 = vrcp.pop %v1318
        %v1320 = vmul.f32 %v1316, %v1319
        %v1321 = vmul.f32 %v1311, 2.0
        %v1322 = vadd.f32 %v1321, 6.5025
        %v1323 = vadd.f32 %v1309, %v1310
        %v1324 = vadd.f32 %v1323, 6.5025
        %v1325 = vrcp.pop %v1324
        %v1326 = vmul.f32 %v1322, %v1325
        %v1327 = vmul.f32 %v1326, %v1320
        %v1328 = vsel %vm787, %v1327, 0.0
        %1329 = vadd.xlane.f32.xlu0 %v1328
        %v1330 = vpop.xlane.xlu0 %1329
        %v1331 = vsel %vm791, %v1330, 0.0
        %v1332 = vrot.slane %v1331, 4
        %v1333 = vadd.f32 %v1331, %v1332
        %v1334 = vrot.slane %v1333, 2
        %v1335 = vadd.f32 %v1333, %v1334
        %v1336 = vrot.slane %v1335, 1
        %v1337 = vadd.f32 %v1335, %v1336
        %v1338 = vmul.f32 %v1337, 0.027777778
        %s1339 = scalar_lea.vmem %s255, 1
        %1340 = vst.msk [vmem:[%s1339] sm:$0x1] %vm800, %v1338
        %s1341 = scalar_lea.vmem %s214, 32 [#allocation2]
        %v1342 = vld [vmem:[%s1341] sm:$0xff]
        %v1343 = vld [vmem:[%s1341 + $0x8] sm:$0xff]
        %s1344 = scalar_lea.vmem %s223, 32 [#allocation4]
        %v1345 = vld [vmem:[%s1344] sm:$0xff]
        %v1346 = vld [vmem:[%s1344 + $0x8] sm:$0xff]
        %v1347 = vmul.f32 %v1342, %v1342
        %v1348 = vmul.f32 %v1343, %v1343
        %v1349 = vmul.f32 %v1345, %v1345
        %v1350 = vmul.f32 %v1346, %v1346
        %v1351 = vmul.f32 %v1342, %v1345
        %v1352 = vmul.f32 %v1343, %v1346
        %v1354 = vsel %vm269, %v1342, 0
        %v1357 = vsel %vm269, %v1343, 0
        %v1360 = vsel %vm269, %v1345, 0
        %v1363 = vsel %vm269, %v1346, 0
        %v1366 = vsel %vm269, %v1347, 0
        %v1369 = vsel %vm269, %v1348, 0
        %v1372 = vsel %vm269, %v1349, 0
        %v1375 = vsel %vm269, %v1350, 0
        %v1378 = vsel %vm269, %v1351, 0
        %v1381 = vsel %vm269, %v1352, 0
        %1383 = vmatprep.subr.mxu0 0.0
        %1384 = vmatpush1.msra.mxu0 0.0
        %1385 = vmatprep.subr.mxu0 0.0
        %1386 = vmatpush1.msra.mxu0 0.0
        %1387 = vmatprep.subr.mxu0 0.0
        %1388 = vmatpush1.msra.mxu0 0.0
        %1389 = vmatprep.subr.mxu0 0.0
        %1390 = vmatpush1.msra.mxu0 0.0
        %1391 = vmatprep.subr.mxu0 0.0
        %1392 = vmatpush1.msra.mxu0 0.0
        %1393 = vmatprep.subr.mxu0 0.0
        %1394 = vmatpush1.msra.mxu0 0.0
        %1395 = vmatprep.subr.mxu0 0.0
        %1396 = vmatpush1.msra.mxu0 0.0
        %1397 = vmatprep.subr.mxu0 0.0
        %1398 = vmatpush1.msra.mxu0 0.0
        %1399 = vmatprep.subr.mxu0 0.0
        %1400 = vmatpush1.msra.mxu0 0.0
        %1401 = vmatprep.subr.mxu0 0.0
        %1402 = vmatpush1.msra.mxu0 0.0
        %1403 = vmatprep.subr.mxu0 0.0
        %1404 = vmatpush1.msra.mxu0 0.0
        %1405 = vmatprep.subr.mxu0 0.0
        %1406 = vmatpush1.msra.mxu0 0.0
        %1407 = vmatprep.subr.mxu0 0.0
        %1408 = vmatpush1.msra.mxu0 0.0
        %1409 = vmatprep.subr.mxu0 0.0
        %1410 = vmatpush1.msra.mxu0 0.0
        %1411 = vmatprep.subr.mxu0 0.0
        %1412 = vmatpush1.msra.mxu0 %v258
        %1413 = vmatprep.subr.mxu0 0.0
        %1414 = vmatpush1.msra.mxu0 %v257
        %1415 = vmatprep.subr.mxu0 0.0
        %1416 = vmatpush2.msra.mxu0 0.0
        %1417 = vmatprep.subr.mxu0 0.0
        %1418 = vmatpush2.msra.mxu0 0.0
        %1419 = vmatprep.subr.mxu0 0.0
        %1420 = vmatpush2.msra.mxu0 0.0
        %1421 = vmatprep.subr.mxu0 0.0
        %1422 = vmatpush2.msra.mxu0 0.0
        %1423 = vmatprep.subr.mxu0 0.0
        %1424 = vmatpush2.msra.mxu0 0.0
        %1425 = vmatprep.subr.mxu0 0.0
        %1426 = vmatpush2.msra.mxu0 0.0
        %1427 = vmatprep.subr.mxu0 0.0
        %1428 = vmatpush2.msra.mxu0 0.0
        %1429 = vmatprep.subr.mxu0 0.0
        %1430 = vmatpush2.msra.mxu0 0.0
        %1431 = vmatprep.subr.mxu0 0.0
        %1432 = vmatpush2.msra.mxu0 0.0
        %1433 = vmatprep.subr.mxu0 0.0
        %1434 = vmatpush2.msra.mxu0 0.0
        %1435 = vmatprep.subr.mxu0 0.0
        %1436 = vmatpush2.msra.mxu0 0.0
        %1437 = vmatprep.subr.mxu0 0.0
        %1438 = vmatpush2.msra.mxu0 0.0
        %1439 = vmatprep.subr.mxu0 0.0
        %1440 = vmatpush2.msra.mxu0 0.0
        %1441 = vmatprep.subr.mxu0 0.0
        %1442 = vmatpush2.msra.mxu0 0.0
        %1443 = vmatprep.subr.mxu0 0.0
        %1444 = vmatpush2.msra.mxu0 0.0
        %1445 = vmatprep.subr.mxu0 0.0
        %1446 = vmatpush2.msra.mxu0 0.0
        %1447 = vmatprep.mubr.f32.mxu0 0.0
        %1448 = vmatmul.mubr.f32.gmra.mxu0 %v1354
        %v1449 = vpop.f32.mrf.mxu0
        %v1450 = vadd.f32 0.0, %v1449
        %v1451 = vpop.f32.mrf.mxu0
        %1452 = vmatprep.mubr.f32.mxu0 0.0
        %1453 = vmatmul.mubr.f32.gmra.mxu0 %v1357
        %v1454 = vpop.f32.mrf.mxu0
        %v1455 = vadd.f32 0.0, %v1454
        %v1456 = vpop.f32.mrf.mxu0
        %1457 = vmatprep.mubr.f32.mxu0 0.0
        %1458 = vmatmul.mubr.f32.gmra.mxu0 %v1360
        %v1459 = vpop.f32.mrf.mxu0
        %v1460 = vadd.f32 0.0, %v1459
        %v1461 = vpop.f32.mrf.mxu0
        %1462 = vmatprep.mubr.f32.mxu0 0.0
        %1463 = vmatmul.mubr.f32.gmra.mxu0 %v1363
        %v1464 = vpop.f32.mrf.mxu0
        %v1465 = vadd.f32 0.0, %v1464
        %v1466 = vpop.f32.mrf.mxu0
        %1467 = vmatprep.mubr.f32.mxu0 0.0
        %1468 = vmatmul.mubr.f32.gmra.mxu0 %v1366
        %v1469 = vpop.f32.mrf.mxu0
        %v1470 = vadd.f32 0.0, %v1469
        %v1471 = vpop.f32.mrf.mxu0
        %1472 = vmatprep.mubr.f32.mxu0 0.0
        %1473 = vmatmul.mubr.f32.gmra.mxu0 %v1369
        %v1474 = vpop.f32.mrf.mxu0
        %v1475 = vadd.f32 0.0, %v1474
        %v1476 = vpop.f32.mrf.mxu0
        %1477 = vmatprep.mubr.f32.mxu0 0.0
        %1478 = vmatmul.mubr.f32.gmra.mxu0 %v1372
        %v1479 = vpop.f32.mrf.mxu0
        %v1480 = vadd.f32 0.0, %v1479
        %v1481 = vpop.f32.mrf.mxu0
        %1482 = vmatprep.mubr.f32.mxu0 0.0
        %1483 = vmatmul.mubr.f32.gmra.mxu0 %v1375
        %v1484 = vpop.f32.mrf.mxu0
        %v1485 = vadd.f32 0.0, %v1484
        %v1486 = vpop.f32.mrf.mxu0
        %1487 = vmatprep.mubr.f32.mxu0 0.0
        %1488 = vmatmul.mubr.f32.gmra.mxu0 %v1378
        %v1489 = vpop.f32.mrf.mxu0
        %v1490 = vadd.f32 0.0, %v1489
        %v1491 = vpop.f32.mrf.mxu0
        %1492 = vmatprep.mubr.f32.mxu0 0.0
        %1493 = vmatmul.mubr.f32.gmra.mxu0 %v1381
        %v1494 = vpop.f32.mrf.mxu0
        %v1495 = vadd.f32 0.0, %v1494
        %v1496 = vpop.f32.mrf.mxu0
        %1497 = vdwg.mxu0
        %1498 = vmatprep.subr.mxu0 0.0
        %1499 = vmatpush1.msra.mxu0 0.0
        %1500 = vmatprep.subr.mxu0 0.0
        %1501 = vmatpush1.msra.mxu0 0.0
        %1502 = vmatprep.subr.mxu0 0.0
        %1503 = vmatpush1.msra.mxu0 0.0
        %1504 = vmatprep.subr.mxu0 0.0
        %1505 = vmatpush1.msra.mxu0 0.0
        %1506 = vmatprep.subr.mxu0 0.0
        %1507 = vmatpush1.msra.mxu0 0.0
        %1508 = vmatprep.subr.mxu0 0.0
        %1509 = vmatpush1.msra.mxu0 0.0
        %1510 = vmatprep.subr.mxu0 0.0
        %1511 = vmatpush1.msra.mxu0 0.0
        %1512 = vmatprep.subr.mxu0 0.0
        %1513 = vmatpush1.msra.mxu0 0.0
        %1514 = vmatprep.subr.mxu0 0.0
        %1515 = vmatpush1.msra.mxu0 0.0
        %1516 = vmatprep.subr.mxu0 0.0
        %1517 = vmatpush1.msra.mxu0 0.0
        %1518 = vmatprep.subr.mxu0 0.0
        %1519 = vmatpush1.msra.mxu0 0.0
        %1520 = vmatprep.subr.mxu0 0.0
        %1521 = vmatpush1.msra.mxu0 0.0
        %1522 = vmatprep.subr.mxu0 0.0
        %1523 = vmatpush1.msra.mxu0 0.0
        %1524 = vmatprep.subr.mxu0 0.0
        %1525 = vmatpush1.msra.mxu0 0.0
        %1526 = vmatprep.subr.mxu0 0.0
        %1527 = vmatpush1.msra.mxu0 %v1455
        %1528 = vmatprep.subr.mxu0 0.0
        %1529 = vmatpush1.msra.mxu0 %v1450
        %1530 = vmatprep.subr.mxu0 0.0
        %1531 = vmatpush2.msra.mxu0 0.0
        %1532 = vmatprep.subr.mxu0 0.0
        %1533 = vmatpush2.msra.mxu0 0.0
        %1534 = vmatprep.subr.mxu0 0.0
        %1535 = vmatpush2.msra.mxu0 0.0
        %1536 = vmatprep.subr.mxu0 0.0
        %1537 = vmatpush2.msra.mxu0 0.0
        %1538 = vmatprep.subr.mxu0 0.0
        %1539 = vmatpush2.msra.mxu0 0.0
        %1540 = vmatprep.subr.mxu0 0.0
        %1541 = vmatpush2.msra.mxu0 0.0
        %1542 = vmatprep.subr.mxu0 0.0
        %1543 = vmatpush2.msra.mxu0 0.0
        %1544 = vmatprep.subr.mxu0 0.0
        %1545 = vmatpush2.msra.mxu0 0.0
        %1546 = vmatprep.subr.mxu0 0.0
        %1547 = vmatpush2.msra.mxu0 0.0
        %1548 = vmatprep.subr.mxu0 0.0
        %1549 = vmatpush2.msra.mxu0 0.0
        %1550 = vmatprep.subr.mxu0 0.0
        %1551 = vmatpush2.msra.mxu0 0.0
        %1552 = vmatprep.subr.mxu0 0.0
        %1553 = vmatpush2.msra.mxu0 0.0
        %1554 = vmatprep.subr.mxu0 0.0
        %1555 = vmatpush2.msra.mxu0 0.0
        %1556 = vmatprep.subr.mxu0 0.0
        %1557 = vmatpush2.msra.mxu0 0.0
        %1558 = vmatprep.subr.mxu0 0.0
        %1559 = vmatpush2.msra.mxu0 0.0
        %1560 = vmatprep.subr.mxu0 0.0
        %1561 = vmatpush2.msra.mxu0 0.0
        %1562 = vmatprep.mubr.f32.mxu0 0.0
        %1563 = vmatmul.mubr.f32.gmra.mxu0 %v416
        %v1564 = vpop.f32.mrf.mxu0
        %v1565 = vadd.f32 0.0, %v1564
        %v1566 = vpop.f32.mrf.mxu0
        %1567 = vdwg.mxu0
        %1568 = vmatprep.subr.mxu0 0.0
        %1569 = vmatpush1.msra.mxu0 0.0
        %1570 = vmatprep.subr.mxu0 0.0
        %1571 = vmatpush1.msra.mxu0 0.0
        %1572 = vmatprep.subr.mxu0 0.0
        %1573 = vmatpush1.msra.mxu0 0.0
        %1574 = vmatprep.subr.mxu0 0.0
        %1575 = vmatpush1.msra.mxu0 0.0
        %1576 = vmatprep.subr.mxu0 0.0
        %1577 = vmatpush1.msra.mxu0 0.0
        %1578 = vmatprep.subr.mxu0 0.0
        %1579 = vmatpush1.msra.mxu0 0.0
        %1580 = vmatprep.subr.mxu0 0.0
        %1581 = vmatpush1.msra.mxu0 0.0
        %1582 = vmatprep.subr.mxu0 0.0
        %1583 = vmatpush1.msra.mxu0 0.0
        %1584 = vmatprep.subr.mxu0 0.0
        %1585 = vmatpush1.msra.mxu0 0.0
        %1586 = vmatprep.subr.mxu0 0.0
        %1587 = vmatpush1.msra.mxu0 0.0
        %1588 = vmatprep.subr.mxu0 0.0
        %1589 = vmatpush1.msra.mxu0 0.0
        %1590 = vmatprep.subr.mxu0 0.0
        %1591 = vmatpush1.msra.mxu0 0.0
        %1592 = vmatprep.subr.mxu0 0.0
        %1593 = vmatpush1.msra.mxu0 0.0
        %1594 = vmatprep.subr.mxu0 0.0
        %1595 = vmatpush1.msra.mxu0 0.0
        %1596 = vmatprep.subr.mxu0 0.0
        %1597 = vmatpush1.msra.mxu0 %v1465
        %1598 = vmatprep.subr.mxu0 0.0
        %1599 = vmatpush1.msra.mxu0 %v1460
        %1600 = vmatprep.subr.mxu0 0.0
        %1601 = vmatpush2.msra.mxu0 0.0
        %1602 = vmatprep.subr.mxu0 0.0
        %1603 = vmatpush2.msra.mxu0 0.0
        %1604 = vmatprep.subr.mxu0 0.0
        %1605 = vmatpush2.msra.mxu0 0.0
        %1606 = vmatprep.subr.mxu0 0.0
        %1607 = vmatpush2.msra.mxu0 0.0
        %1608 = vmatprep.subr.mxu0 0.0
        %1609 = vmatpush2.msra.mxu0 0.0
        %1610 = vmatprep.subr.mxu0 0.0
        %1611 = vmatpush2.msra.mxu0 0.0
        %1612 = vmatprep.subr.mxu0 0.0
        %1613 = vmatpush2.msra.mxu0 0.0
        %1614 = vmatprep.subr.mxu0 0.0
        %1615 = vmatpush2.msra.mxu0 0.0
        %1616 = vmatprep.subr.mxu0 0.0
        %1617 = vmatpush2.msra.mxu0 0.0
        %1618 = vmatprep.subr.mxu0 0.0
        %1619 = vmatpush2.msra.mxu0 0.0
        %1620 = vmatprep.subr.mxu0 0.0
        %1621 = vmatpush2.msra.mxu0 0.0
        %1622 = vmatprep.subr.mxu0 0.0
        %1623 = vmatpush2.msra.mxu0 0.0
        %1624 = vmatprep.subr.mxu0 0.0
        %1625 = vmatpush2.msra.mxu0 0.0
        %1626 = vmatprep.subr.mxu0 0.0
        %1627 = vmatpush2.msra.mxu0 0.0
        %1628 = vmatprep.subr.mxu0 0.0
        %1629 = vmatpush2.msra.mxu0 0.0
        %1630 = vmatprep.subr.mxu0 0.0
        %1631 = vmatpush2.msra.mxu0 0.0
        %1632 = vmatprep.mubr.f32.mxu0 0.0
        %1633 = vmatmul.mubr.f32.gmra.mxu0 %v416
        %v1634 = vpop.f32.mrf.mxu0
        %v1635 = vadd.f32 0.0, %v1634
        %v1636 = vpop.f32.mrf.mxu0
        %1637 = vdwg.mxu0
        %1638 = vmatprep.subr.mxu0 0.0
        %1639 = vmatpush1.msra.mxu0 0.0
        %1640 = vmatprep.subr.mxu0 0.0
        %1641 = vmatpush1.msra.mxu0 0.0
        %1642 = vmatprep.subr.mxu0 0.0
        %1643 = vmatpush1.msra.mxu0 0.0
        %1644 = vmatprep.subr.mxu0 0.0
        %1645 = vmatpush1.msra.mxu0 0.0
        %1646 = vmatprep.subr.mxu0 0.0
        %1647 = vmatpush1.msra.mxu0 0.0
        %1648 = vmatprep.subr.mxu0 0.0
        %1649 = vmatpush1.msra.mxu0 0.0
        %1650 = vmatprep.subr.mxu0 0.0
        %1651 = vmatpush1.msra.mxu0 0.0
        %1652 = vmatprep.subr.mxu0 0.0
        %1653 = vmatpush1.msra.mxu0 0.0
        %1654 = vmatprep.subr.mxu0 0.0
        %1655 = vmatpush1.msra.mxu0 0.0
        %1656 = vmatprep.subr.mxu0 0.0
        %1657 = vmatpush1.msra.mxu0 0.0
        %1658 = vmatprep.subr.mxu0 0.0
        %1659 = vmatpush1.msra.mxu0 0.0
        %1660 = vmatprep.subr.mxu0 0.0
        %1661 = vmatpush1.msra.mxu0 0.0
        %1662 = vmatprep.subr.mxu0 0.0
        %1663 = vmatpush1.msra.mxu0 0.0
        %1664 = vmatprep.subr.mxu0 0.0
        %1665 = vmatpush1.msra.mxu0 0.0
        %1666 = vmatprep.subr.mxu0 0.0
        %1667 = vmatpush1.msra.mxu0 %v1475
        %1668 = vmatprep.subr.mxu0 0.0
        %1669 = vmatpush1.msra.mxu0 %v1470
        %1670 = vmatprep.subr.mxu0 0.0
        %1671 = vmatpush2.msra.mxu0 0.0
        %1672 = vmatprep.subr.mxu0 0.0
        %1673 = vmatpush2.msra.mxu0 0.0
        %1674 = vmatprep.subr.mxu0 0.0
        %1675 = vmatpush2.msra.mxu0 0.0
        %1676 = vmatprep.subr.mxu0 0.0
        %1677 = vmatpush2.msra.mxu0 0.0
        %1678 = vmatprep.subr.mxu0 0.0
        %1679 = vmatpush2.msra.mxu0 0.0
        %1680 = vmatprep.subr.mxu0 0.0
        %1681 = vmatpush2.msra.mxu0 0.0
        %1682 = vmatprep.subr.mxu0 0.0
        %1683 = vmatpush2.msra.mxu0 0.0
        %1684 = vmatprep.subr.mxu0 0.0
        %1685 = vmatpush2.msra.mxu0 0.0
        %1686 = vmatprep.subr.mxu0 0.0
        %1687 = vmatpush2.msra.mxu0 0.0
        %1688 = vmatprep.subr.mxu0 0.0
        %1689 = vmatpush2.msra.mxu0 0.0
        %1690 = vmatprep.subr.mxu0 0.0
        %1691 = vmatpush2.msra.mxu0 0.0
        %1692 = vmatprep.subr.mxu0 0.0
        %1693 = vmatpush2.msra.mxu0 0.0
        %1694 = vmatprep.subr.mxu0 0.0
        %1695 = vmatpush2.msra.mxu0 0.0
        %1696 = vmatprep.subr.mxu0 0.0
        %1697 = vmatpush2.msra.mxu0 0.0
        %1698 = vmatprep.subr.mxu0 0.0
        %1699 = vmatpush2.msra.mxu0 0.0
        %1700 = vmatprep.subr.mxu0 0.0
        %1701 = vmatpush2.msra.mxu0 0.0
        %1702 = vmatprep.mubr.f32.mxu0 0.0
        %1703 = vmatmul.mubr.f32.gmra.mxu0 %v416
        %v1704 = vpop.f32.mrf.mxu0
        %v1705 = vadd.f32 0.0, %v1704
        %v1706 = vpop.f32.mrf.mxu0
        %1707 = vdwg.mxu0
        %1708 = vmatprep.subr.mxu0 0.0
        %1709 = vmatpush1.msra.mxu0 0.0
        %1710 = vmatprep.subr.mxu0 0.0
        %1711 = vmatpush1.msra.mxu0 0.0
        %1712 = vmatprep.subr.mxu0 0.0
        %1713 = vmatpush1.msra.mxu0 0.0
        %1714 = vmatprep.subr.mxu0 0.0
        %1715 = vmatpush1.msra.mxu0 0.0
        %1716 = vmatprep.subr.mxu0 0.0
        %1717 = vmatpush1.msra.mxu0 0.0
        %1718 = vmatprep.subr.mxu0 0.0
        %1719 = vmatpush1.msra.mxu0 0.0
        %1720 = vmatprep.subr.mxu0 0.0
        %1721 = vmatpush1.msra.mxu0 0.0
        %1722 = vmatprep.subr.mxu0 0.0
        %1723 = vmatpush1.msra.mxu0 0.0
        %1724 = vmatprep.subr.mxu0 0.0
        %1725 = vmatpush1.msra.mxu0 0.0
        %1726 = vmatprep.subr.mxu0 0.0
        %1727 = vmatpush1.msra.mxu0 0.0
        %1728 = vmatprep.subr.mxu0 0.0
        %1729 = vmatpush1.msra.mxu0 0.0
        %1730 = vmatprep.subr.mxu0 0.0
        %1731 = vmatpush1.msra.mxu0 0.0
        %1732 = vmatprep.subr.mxu0 0.0
        %1733 = vmatpush1.msra.mxu0 0.0
        %1734 = vmatprep.subr.mxu0 0.0
        %1735 = vmatpush1.msra.mxu0 0.0
        %1736 = vmatprep.subr.mxu0 0.0
        %1737 = vmatpush1.msra.mxu0 %v1485
        %1738 = vmatprep.subr.mxu0 0.0
        %1739 = vmatpush1.msra.mxu0 %v1480
        %1740 = vmatprep.subr.mxu0 0.0
        %1741 = vmatpush2.msra.mxu0 0.0
        %1742 = vmatprep.subr.mxu0 0.0
        %1743 = vmatpush2.msra.mxu0 0.0
        %1744 = vmatprep.subr.mxu0 0.0
        %1745 = vmatpush2.msra.mxu0 0.0
        %1746 = vmatprep.subr.mxu0 0.0
        %1747 = vmatpush2.msra.mxu0 0.0
        %1748 = vmatprep.subr.mxu0 0.0
        %1749 = vmatpush2.msra.mxu0 0.0
        %1750 = vmatprep.subr.mxu0 0.0
        %1751 = vmatpush2.msra.mxu0 0.0
        %1752 = vmatprep.subr.mxu0 0.0
        %1753 = vmatpush2.msra.mxu0 0.0
        %1754 = vmatprep.subr.mxu0 0.0
        %1755 = vmatpush2.msra.mxu0 0.0
        %1756 = vmatprep.subr.mxu0 0.0
        %1757 = vmatpush2.msra.mxu0 0.0
        %1758 = vmatprep.subr.mxu0 0.0
        %1759 = vmatpush2.msra.mxu0 0.0
        %1760 = vmatprep.subr.mxu0 0.0
        %1761 = vmatpush2.msra.mxu0 0.0
        %1762 = vmatprep.subr.mxu0 0.0
        %1763 = vmatpush2.msra.mxu0 0.0
        %1764 = vmatprep.subr.mxu0 0.0
        %1765 = vmatpush2.msra.mxu0 0.0
        %1766 = vmatprep.subr.mxu0 0.0
        %1767 = vmatpush2.msra.mxu0 0.0
        %1768 = vmatprep.subr.mxu0 0.0
        %1769 = vmatpush2.msra.mxu0 0.0
        %1770 = vmatprep.subr.mxu0 0.0
        %1771 = vmatpush2.msra.mxu0 0.0
        %1772 = vmatprep.mubr.f32.mxu0 0.0
        %1773 = vmatmul.mubr.f32.gmra.mxu0 %v416
        %v1774 = vpop.f32.mrf.mxu0
        %v1775 = vadd.f32 0.0, %v1774
        %v1776 = vpop.f32.mrf.mxu0
        %1777 = vdwg.mxu0
        %1778 = vmatprep.subr.mxu0 0.0
        %1779 = vmatpush1.msra.mxu0 0.0
        %1780 = vmatprep.subr.mxu0 0.0
        %1781 = vmatpush1.msra.mxu0 0.0
        %1782 = vmatprep.subr.mxu0 0.0
        %1783 = vmatpush1.msra.mxu0 0.0
        %1784 = vmatprep.subr.mxu0 0.0
        %1785 = vmatpush1.msra.mxu0 0.0
        %1786 = vmatprep.subr.mxu0 0.0
        %1787 = vmatpush1.msra.mxu0 0.0
        %1788 = vmatprep.subr.mxu0 0.0
        %1789 = vmatpush1.msra.mxu0 0.0
        %1790 = vmatprep.subr.mxu0 0.0
        %1791 = vmatpush1.msra.mxu0 0.0
        %1792 = vmatprep.subr.mxu0 0.0
        %1793 = vmatpush1.msra.mxu0 0.0
        %1794 = vmatprep.subr.mxu0 0.0
        %1795 = vmatpush1.msra.mxu0 0.0
        %1796 = vmatprep.subr.mxu0 0.0
        %1797 = vmatpush1.msra.mxu0 0.0
        %1798 = vmatprep.subr.mxu0 0.0
        %1799 = vmatpush1.msra.mxu0 0.0
        %1800 = vmatprep.subr.mxu0 0.0
        %1801 = vmatpush1.msra.mxu0 0.0
        %1802 = vmatprep.subr.mxu0 0.0
        %1803 = vmatpush1.msra.mxu0 0.0
        %1804 = vmatprep.subr.mxu0 0.0
        %1805 = vmatpush1.msra.mxu0 0.0
        %1806 = vmatprep.subr.mxu0 0.0
        %1807 = vmatpush1.msra.mxu0 %v1495
        %1808 = vmatprep.subr.mxu0 0.0
        %1809 = vmatpush1.msra.mxu0 %v1490
        %1810 = vmatprep.subr.mxu0 0.0
        %1811 = vmatpush2.msra.mxu0 0.0
        %1812 = vmatprep.subr.mxu0 0.0
        %1813 = vmatpush2.msra.mxu0 0.0
        %1814 = vmatprep.subr.mxu0 0.0
        %1815 = vmatpush2.msra.mxu0 0.0
        %1816 = vmatprep.subr.mxu0 0.0
        %1817 = vmatpush2.msra.mxu0 0.0
        %1818 = vmatprep.subr.mxu0 0.0
        %1819 = vmatpush2.msra.mxu0 0.0
        %1820 = vmatprep.subr.mxu0 0.0
        %1821 = vmatpush2.msra.mxu0 0.0
        %1822 = vmatprep.subr.mxu0 0.0
        %1823 = vmatpush2.msra.mxu0 0.0
        %1824 = vmatprep.subr.mxu0 0.0
        %1825 = vmatpush2.msra.mxu0 0.0
        %1826 = vmatprep.subr.mxu0 0.0
        %1827 = vmatpush2.msra.mxu0 0.0
        %1828 = vmatprep.subr.mxu0 0.0
        %1829 = vmatpush2.msra.mxu0 0.0
        %1830 = vmatprep.subr.mxu0 0.0
        %1831 = vmatpush2.msra.mxu0 0.0
        %1832 = vmatprep.subr.mxu0 0.0
        %1833 = vmatpush2.msra.mxu0 0.0
        %1834 = vmatprep.subr.mxu0 0.0
        %1835 = vmatpush2.msra.mxu0 0.0
        %1836 = vmatprep.subr.mxu0 0.0
        %1837 = vmatpush2.msra.mxu0 0.0
        %1838 = vmatprep.subr.mxu0 0.0
        %1839 = vmatpush2.msra.mxu0 0.0
        %1840 = vmatprep.subr.mxu0 0.0
        %1841 = vmatpush2.msra.mxu0 0.0
        %1842 = vmatprep.mubr.f32.mxu0 0.0
        %1843 = vmatmul.mubr.f32.gmra.mxu0 %v416
        %v1844 = vpop.f32.mrf.mxu0
        %v1845 = vadd.f32 0.0, %v1844
        %v1846 = vpop.f32.mrf.mxu0
        %1847 = vdwg.mxu0
        %v1848 = vmul.f32 %v1565, %v1565
        %v1849 = vmul.f32 %v1635, %v1635
        %v1850 = vmul.f32 %v1565, %v1635
        %v1851 = vsub.f32 %v1705, %v1848
        %v1852 = vsub.f32 %v1775, %v1849
        %v1853 = vsub.f32 %v1845, %v1850
        %v1854 = vmul.f32 %v1853, 2.0
        %v1855 = vadd.f32 %v1854, 58.5225
        %v1856 = vadd.f32 %v1851, %v1852
        %v1857 = vadd.f32 %v1856, 58.5225
        %v1858 = vrcp.pop %v1857
        %v1859 = vmul.f32 %v1855, %v1858
        %v1860 = vmul.f32 %v1850, 2.0
        %v1861 = vadd.f32 %v1860, 6.5025
        %v1862 = vadd.f32 %v1848, %v1849
        %v1863 = vadd.f32 %v1862, 6.5025
        %v1864 = vrcp.pop %v1863
        %v1865 = vmul.f32 %v1861, %v1864
        %v1866 = vmul.f32 %v1865, %v1859
        %v1867 = vsel %vm787, %v1866, 0.0
        %1868 = vadd.xlane.f32.xlu0 %v1867
        %v1869 = vpop.xlane.xlu0 %1868
        %v1870 = vsel %vm791, %v1869, 0.0
        %v1871 = vrot.slane %v1870, 4
        %v1872 = vadd.f32 %v1870, %v1871
        %v1873 = vrot.slane %v1872, 2
        %v1874 = vadd.f32 %v1872, %v1873
        %v1875 = vrot.slane %v1874, 1
        %v1876 = vadd.f32 %v1874, %v1875
        %v1877 = vmul.f32 %v1876, 0.027777778
        %s1878 = scalar_lea.vmem %s255, 2
        %1879 = vst.msk [vmem:[%s1878] sm:$0x1] %vm800, %v1877
        %p1880 = scmp.lt.s32.totalorder %s21, 1
        %s1881 = scalar_select %p1880, %s21, 1
        %s1882 = smul.addr %s1881, 3
        %s1883 = scalar_lea.vmem %s4, %s1882
        // Predicated region
        $region45: #{tpu_custom_call.1} parent=35 // pred_check
          %p1884 = pneg %p133
        $region46: #{tpu_custom_call.1} parent=35 // pred_check_branch
          %1886 = sbr.rel (%p1884) target = $region48
        $region47: #{tpu_custom_call.1} parent=35 // pred_region
          _
        $region48: #{tpu_custom_call.1} parent=35 // pred_fallthru
          _
      $region36: #{tpu_custom_call.1} parent=5 // pred_fallthru
        _
      %p1887 = scmp.le.s32.totalorder 2, %s16
      // Predicated region
      $region49: #{tpu_custom_call.1} parent=5 // pred_check
        %p1888 = pneg %p1887
      $region50: #{tpu_custom_call.1} parent=5 // pred_check_branch
        %1890 = sbr.rel (%p1888) target = $region52
      $region51: #{tpu_custom_call.1} parent=5 // pred_region
        %s1891 = ssub.s32 %s16, 2
        // Predicated region
        $region53: #{tpu_custom_call.1} parent=51 // pred_check
          %p1892 = pneg %p139
        $region54: #{tpu_custom_call.1} parent=51 // pred_check_branch
          %1894 = sbr.rel (%p1892) target = $region56
        $region55: #{tpu_custom_call.1} parent=51 // pred_region
          %p1895 = scmp.lt.s32.totalorder %s22, 1
          %s1896 = scalar_select %p1895, %s22, 1
          %s1897 = smul.addr %s1896, 3
          %s1898 = scalar_lea.vmem %s4, %s1897
        $region56: #{tpu_custom_call.1} parent=51 // pred_fallthru
          _
      $region52: #{tpu_custom_call.1} parent=5 // pred_fallthru
        _
    $region6: #{tpu_custom_call.1} parent=1 // loop_footer
      %s20 = sadd.s32 1, %s16
    $region7: #{tpu_custom_call.1} parent=1 // loop_footer_branch
      %15 = sbr.rel target = $region3
    $region8: #{tpu_custom_call.1} parent=1 // loop_exit
      _
    %1899 = vsyncpa [#allocation3], 1
    %s1900 = scalar_lea.sflag [#allocation3], 1
    %1901 = vsyncpa %s1900, 1
    %1902 = vsyncpa [#allocation5], 1
    %s1903 = scalar_lea.sflag [#allocation5], 1
    %1904 = vsyncpa %s1903, 1

</llo_original>
